<compile_context>
chip_gen: v7x
topology: tpu7x:2x2x1
jax: 0.10.0
libtpu: 0.0.40
codegen_flags: <defaults>
</compile_context>

<pallas_src>
import functools

import jax
import jax.numpy as jnp
import numpy as np
from jax.experimental import pallas as pl
from jax.experimental.pallas import tpu as pltpu

EPS = 1e-5


# --------------------------------------------------------------------------
# Pass A: per-channel sum and sum-of-squares of x (for bn0 statistics).
# Accumulators live in output blocks whose index_map is constant, so they stay
# resident in VMEM across the whole grid.
# --------------------------------------------------------------------------
def _colstats_kernel(x_ref, sum_ref, sq_ref):
    @pl.when((pl.program_id(0) == 0) & (pl.program_id(1) == 0))
    def _init():
        sum_ref[...] = jnp.zeros_like(sum_ref)
        sq_ref[...] = jnp.zeros_like(sq_ref)

    x = x_ref[0].astype(jnp.float32)                       # (C, TS)
    sum_ref[...] += jnp.sum(x, axis=1, keepdims=True)
    sq_ref[...] += jnp.sum(x * x, axis=1, keepdims=True)


# --------------------------------------------------------------------------
# Pass B: h = W @ x + b  (1x1 conv with the preceding BN folded into W, b),
# plus per-channel sum / sum-of-squares of h for the next BN.
# --------------------------------------------------------------------------
def _conv1x1_stats_kernel(x_ref, w_ref, b_ref, h_ref, sum_ref, sq_ref):
    @pl.when((pl.program_id(0) == 0) & (pl.program_id(1) == 0))
    def _init():
        sum_ref[...] = jnp.zeros_like(sum_ref)
        sq_ref[...] = jnp.zeros_like(sq_ref)

    x = x_ref[0].astype(jnp.float32)                       # (C, TS)
    h = jnp.dot(w_ref[...], x, preferred_element_type=jnp.float32) + b_ref[...]
    h_ref[0] = h.astype(h_ref.dtype)
    sum_ref[...] += jnp.sum(h, axis=1, keepdims=True)
    sq_ref[...] += jnp.sum(h * h, axis=1, keepdims=True)


# --------------------------------------------------------------------------
# Pass C: 3x3 conv (pad=1, stride=1) on bn1(h1), done per image entirely in
# VMEM as 9 accumulated shifted matmuls on the flattened (C, H*W) slab with
# zero padding + column masks for the W edges.  Also accumulates the per-channel
# sum and the (P, P) second moment of h2 so bn2/bn3 stats need no extra pass.
# --------------------------------------------------------------------------
def _conv3x3_kernel(h1_ref, s1_ref, t1_ref, w_ref, h2_ref, sum_ref, m2_ref, *, width):
    @pl.when(pl.program_id(0) == 0)
    def _init():
        sum_ref[...] = jnp.zeros_like(sum_ref)
        m2_ref[...] = jnp.zeros_like(m2_ref)

    y = h1_ref[0].astype(jnp.float32) * s1_ref[...] + t1_ref[...]   # bn1, (P, S)
    n_ch, s_len = y.shape
    zpad = jnp.zeros((n_ch, width + 1), jnp.float32)
    buf = jnp.concatenate([zpad, y, zpad], axis=1)                  # (P, S + 2W + 2)
    col = jax.lax.broadcasted_iota(jnp.int32, (1, s_len), 1) % width

    acc = jnp.zeros((n_ch, s_len), jnp.float32)
    for ky in range(3):
        for kx in range(3):
            shift = (ky - 1) * width + (kx - 1)
            start = width + 1 + shift
            win = buf[:, start:start + s_len]
            if kx == 0:      # reads the pixel to the left: invalid at column 0
                win = jnp.where(col >= 1, win, 0.0)
            elif kx == 2:    # reads the pixel to the right: invalid at column W-1
                win = jnp.where(col <= width - 2, win, 0.0)
            acc = acc + jnp.dot(w_ref[3 * ky + kx], win,
                                preferred_element_type=jnp.float32)

    h2_ref[0] = acc.astype(h2_ref.dtype)
    sum_ref[...] += jnp.sum(acc, axis=1, keepdims=True)
    m2_ref[...] += jax.lax.dot_general(acc, acc, (((1,), (1,)), ((), ())),
                                       preferred_element_type=jnp.float32)


# --------------------------------------------------------------------------
# Pass D: out = A3 @ h2 + c3 + x   (conv3 with bn2/bn3 folded in, + residual).
# --------------------------------------------------------------------------
def _conv1x1_residual_kernel(h2_ref, x_ref, a_ref, c_ref, o_ref):
    h2 = h2_ref[0].astype(jnp.float32)                     # (P, TS)
    x = x_ref[0].astype(jnp.float32)                       # (C, TS)
    o = jnp.dot(a_ref[...], h2, preferred_element_type=jnp.float32) + c_ref[...] + x
    o_ref[0] = o.astype(o_ref.dtype)


# --------------------------------------------------------------------------
def _largest_tile(S, target=2048):
    """Largest lane-aligned divisor of S that is <= target (falls back to S)."""
    if S <= target:
        return S
    for t in range(target - target % 128, 0, -128):
        if S % t == 0:
            return t
    return S


def _bn_fold(ssum, ssq, count, gamma, beta):
    mean = ssum / count
    var = ssq / count - mean * mean          # biased (training-mode) variance
    scale = gamma * jax.lax.rsqrt(var + EPS)
    shift = beta - mean * scale
    return scale, shift


def bottleneck_forward(x_nchw, params):
    """Pallas forward for Bottleneck (stride=1, downsample=None, training-mode BN)."""
    N, C, H, W = x_nchw.shape
    P = params["w1"].shape[1]             # planes
    Cout = 4 * P
    assert C == Cout, "residual add requires inplanes == planes*4 when downsample is None"
    S = H * W
    M = float(N * S)
    f32 = jnp.float32

    x3 = x_nchw.reshape(N, C, S).astype(f32)     # channels-first; free reshape
    TS = _largest_tile(S)
    grid2 = (N, S // TS)
    arb2 = pltpu.CompilerParams(dimension_semantics=("arbitrary", "arbitrary"))
    x_spec = pl.BlockSpec((1, C, TS), lambda n, s: (n, 0, s))

    # ---- pass A: bn0 statistics --------------------------------------------
    sum0, sq0 = pl.pallas_call(
        _colstats_kernel,
        out_shape=(jax.ShapeDtypeStruct((C, 1), f32),
                   jax.ShapeDtypeStruct((C, 1), f32)),
        grid=grid2,
        in_specs=[x_spec],
        out_specs=(pl.BlockSpec((C, 1), lambda n, s: (0, 0)),
                   pl.BlockSpec((C, 1), lambda n, s: (0, 0))),
        compiler_params=arb2,
    )(x3)

    s0, t0 = _bn_fold(sum0[:, 0], sq0[:, 0], M, params["g0"], params["b0"])
    w1 = params["w1"]                                   # (C, P)
    W1 = w1.T * s0[None, :]                             # (P, C)   conv1(bn0(.)) weight
    b1v = (w1.T @ t0).reshape(P, 1)                     # (P, 1)   folded bias

    # ---- pass B: h1 = conv1(bn0(x)) + bn1 statistics -------------------------
    h1, sum1, sq1 = pl.pallas_call(
        _conv1x1_stats_kernel,
        out_shape=(jax.ShapeDtypeStruct((N, P, S), f32),
                   jax.ShapeDtypeStruct((P, 1), f32),
                   jax.ShapeDtypeStruct((P, 1), f32)),
        grid=grid2,
        in_specs=[x_spec,
                  pl.BlockSpec((P, C), lambda n, s: (0, 0)),
                  pl.BlockSpec((P, 1), lambda n, s: (0, 0))],
        out_specs=(pl.BlockSpec((1, P, TS), lambda n, s: (n, 0, s)),
                   pl.BlockSpec((P, 1), lambda n, s: (0, 0)),
                   pl.BlockSpec((P, 1), lambda n, s: (0, 0))),
        compiler_params=arb2,
    )(x3, W1, b1v)

    s1, t1 = _bn_fold(sum1[:, 0], sq1[:, 0], M, params["g1"], params["b1"])

    # ---- pass C: h2 = conv2(bn1(h1)) + sum / second moment of h2 -------------
    # w2t[3*ky+kx, co, ci] = w2_hwio[ky, kx, ci, co]
    w2t = jnp.transpose(params["w2_hwio"], (0, 1, 3, 2)).reshape(9, P, P)
    h2, sum2, m2 = pl.pallas_call(
        functools.partial(_conv3x3_kernel, width=W),
        out_shape=(jax.ShapeDtypeStruct((N, P, S), f32),
                   jax.ShapeDtypeStruct((P, 1), f32),
                   jax.ShapeDtypeStruct((P, P), f32)),
        grid=(N,),
        in_specs=[pl.BlockSpec((1, P, S), lambda n: (n, 0, 0)),
                  pl.BlockSpec((P, 1), lambda n: (0, 0)),
                  pl.BlockSpec((P, 1), lambda n: (0, 0)),
                  pl.BlockSpec((9, P, P), lambda n: (0, 0, 0))],
        out_specs=(pl.BlockSpec((1, P, S), lambda n: (n, 0, 0)),
                   pl.BlockSpec((P, 1), lambda n: (0, 0)),
                   pl.BlockSpec((P, P), lambda n: (0, 0))),
        compiler_params=pltpu.CompilerParams(dimension_semantics=("arbitrary",)),
    )(h1, s1.reshape(P, 1), t1.reshape(P, 1), w2t)

    # ---- glue: fold bn2 into conv3, derive bn3 stats analytically ------------
    mean2 = sum2[:, 0] / M
    E2 = m2 / M                                          # E[h2 h2^T], (P, P)
    var2 = jnp.diagonal(E2) - mean2 * mean2
    s2 = params["g2"] * jax.lax.rsqrt(var2 + EPS)
    t2 = params["b2"] - mean2 * s2
    A = params["w3"].T * s2[None, :]                     # (Cout, P): conv3(bn2(.))
    d = params["w3"].T @ t2                              # (Cout,)
    mean3 = A @ mean2 + d
    Cov2 = E2 - jnp.outer(mean2, mean2)
    var3 = jnp.sum((A @ Cov2) * A, axis=1)               # diag(A Cov2 A^T)
    s3 = params["g3"] * jax.lax.rsqrt(var3 + EPS)
    t3 = params["b3"] - mean3 * s3
    A3 = s3[:, None] * A                                 # bn3 scale folded into conv3
    c3 = (s3 * d + t3).reshape(Cout, 1)

    # ---- pass D: out = bn3(conv3(bn2(h2))) + x -------------------------------
    out3 = pl.pallas_call(
        _conv1x1_residual_kernel,
        out_shape=jax.ShapeDtypeStruct((N, Cout, S), f32),
        grid=grid2,
        in_specs=[pl.BlockSpec((1, P, TS), lambda n, s: (n, 0, s)),
                  x_spec,
                  pl.BlockSpec((Cout, P), lambda n, s: (0, 0)),
                  pl.BlockSpec((Cout, 1), lambda n, s: (0, 0))],
        out_specs=pl.BlockSpec((1, Cout, TS), lambda n, s: (n, 0, s)),
        compiler_params=pltpu.CompilerParams(
            dimension_semantics=("parallel", "parallel")),
    )(h2, x3, A3, c3)

    return out3.reshape(N, Cout, H, W)


# ------------------------------ reference -----------------------------------
def _bn_ref(x, gamma, beta):  # NHWC, gamma/beta: (C,)
    mean = x.mean(axis=(0, 1, 2), keepdims=True)
    var = ((x - mean) ** 2).mean(axis=(0, 1, 2), keepdims=True)
    return (x - mean) * jax.lax.rsqrt(var + EPS) * gamma + beta


def bottleneck_ref(x_nchw, params):
    x = jnp.transpose(x_nchw, (0, 2, 3, 1)).astype(jnp.float32)  # NHWC
    P = params["w1"].shape[1]
    dn = ("NHWC", "HWIO", "NHWC")
    h = _bn_ref(x, params["g0"], params["b0"])
    h = jax.lax.conv_general_dilated(h, params["w1"].reshape(1, 1, -1, P),
                                     (1, 1), "VALID", dimension_numbers=dn)
    h = _bn_ref(h, params["g1"], params["b1"])
    h = jax.lax.conv_general_dilated(h, params["w2_hwio"], (1, 1), "SAME",
                                     dimension_numbers=dn)
    h = _bn_ref(h, params["g2"], params["b2"])
    h = jax.lax.conv_general_dilated(h, params["w3"].reshape(1, 1, P, -1),
                                     (1, 1), "VALID", dimension_numbers=dn)
    h = _bn_ref(h, params["g3"], params["b3"])
    h = h + x   # residual (downsample is None)
    return jnp.transpose(h, (0, 3, 1, 2))


# ------------------------------ main -----------------------------------------
if __name__ == "__main__":
    N, H, W = 2, 16, 16
    planes = 4
    inplanes = planes * 4  # == 16, required so the residual add type-checks

    key = jax.random.PRNGKey(0)
    kx, k1, k2, k3 = jax.random.split(key, 4)

    x = jax.random.normal(kx, (N, inplanes, H, W), dtype=jnp.float32)

    # Conv weights (no bias), stored in matmul / HWIO layouts.
    w1 = jax.random.normal(k1, (inplanes, planes), jnp.float32) * 0.1           # 1x1
    w2_hwio = jax.random.normal(k2, (3, 3, planes, planes), jnp.float32) * 0.1  # 3x3
    w3 = jax.random.normal(k3, (planes, planes * 4), jnp.float32) * 0.1         # 1x1

    params = dict(
        w1=w1, w2_hwio=w2_hwio, w3=w3,
        # BatchNorm affine params at PyTorch init (weight=1, bias=0).
        g0=jnp.ones((inplanes,), jnp.float32), b0=jnp.zeros((inplanes,), jnp.float32),
        g1=jnp.ones((planes,), jnp.float32),   b1=jnp.zeros((planes,), jnp.float32),
        g2=jnp.ones((planes,), jnp.float32),   b2=jnp.zeros((planes,), jnp.float32),
        g3=jnp.ones((planes * 4,), jnp.float32), b3=jnp.zeros((planes * 4,), jnp.float32),
    )

    out = jax.block_until_ready(jax.jit(bottleneck_forward)(x, params))
    ref = jax.block_until_ready(bottleneck_ref(x, params))

    assert out.shape == (N, inplanes, H, W), out.shape
    np.testing.assert_allclose(np.asarray(out), np.asarray(ref), rtol=1e-4, atol=1e-4)
    print("KERNEL_OK")
</pallas_src>

<mosaic_0001>
module attributes {stable_mosaic.version = 11 : i64} {
  func.func @_colstats_kernel(%arg0: i32, %arg1: i32, %arg2: memref<1x16x256xf32, #tpu.memory_space<vmem>>, %arg3: memref<16x1xf32, #tpu.memory_space<vmem>>, %arg4: memref<16x1xf32, #tpu.memory_space<vmem>>) attributes {dimension_semantics = [#tpu.dimension_semantics<arbitrary>, #tpu.dimension_semantics<arbitrary>], iteration_bounds = array<i64: 2, 1>, scalar_prefetch = 0 : i64, scratch_operands = 0 : i64, tpu.core_type = #tpu.core_type<tc>, window_params = [{transform_indices = @transform_0, window_bounds = array<i64: 1, 16, 256>}, {pipeline_mode = #tpu.pipeline_mode<synchronous>, transform_indices = @transform_1, window_bounds = array<i64: 16, 1>}, {pipeline_mode = #tpu.pipeline_mode<synchronous>, transform_indices = @transform_2, window_bounds = array<i64: 16, 1>}]} {
    %c0_i32 = arith.constant 0 : i32
    %0 = arith.cmpi eq, %arg0, %c0_i32 : i32
    %c0_i32_0 = arith.constant 0 : i32
    %1 = arith.cmpi eq, %arg1, %c0_i32_0 : i32
    %2 = arith.andi %0, %1 : i1
    %3 = arith.extui %2 : i1 to i32
    %c0_i32_1 = arith.constant 0 : i32
    %4 = arith.cmpi ne, %3, %c0_i32_1 : i32
    scf.if %4 {
      %cst_13 = arith.constant 0.000000e+00 : f32
      %18 = vector.broadcast %cst_13 : f32 to vector<16x1xf32>
      %c0_14 = arith.constant 0 : index
      %c0_15 = arith.constant 0 : index
      %19 = vector.load %arg3[%c0_14, %c0_15] : memref<16x1xf32, #tpu.memory_space<vmem>>, vector<16x1xf32>
      tpu.vector_store %arg3[%c0_14, %c0_15], %18 {strides = array<i32>} : memref<16x1xf32, #tpu.memory_space<vmem>>, vector<16x1xf32>,
      %cst_16 = arith.constant 0.000000e+00 : f32
      %20 = vector.broadcast %cst_16 : f32 to vector<16x1xf32>
      %c0_17 = arith.constant 0 : index
      %c0_18 = arith.constant 0 : index
      %21 = vector.load %arg4[%c0_17, %c0_18] : memref<16x1xf32, #tpu.memory_space<vmem>>, vector<16x1xf32>
      tpu.vector_store %arg4[%c0_17, %c0_18], %20 {strides = array<i32>} : memref<16x1xf32, #tpu.memory_space<vmem>>, vector<16x1xf32>,
    } else {
    }
    %c0 = arith.constant 0 : index
    %c0_2 = arith.constant 0 : index
    %c0_3 = arith.constant 0 : index
    %5 = vector.load %arg2[%c0, %c0_2, %c0_3] : memref<1x16x256xf32, #tpu.memory_space<vmem>>, vector<1x16x256xf32>
    %6 = vector.shape_cast %5 : vector<1x16x256xf32> to vector<16x256xf32>
    %c0_4 = arith.constant 0 : index
    %c0_5 = arith.constant 0 : index
    %7 = vector.load %arg3[%c0_4, %c0_5] : memref<16x1xf32, #tpu.memory_space<vmem>>, vector<16x1xf32>
    %cst = arith.constant dense<0.000000e+00> : vector<16xf32>
    %8 = vector.multi_reduction <add>, %6, %cst [1] : vector<16x256xf32> to vector<16xf32>
    %9 = vector.shape_cast %8 : vector<16xf32> to vector<16x1xf32>
    %10 = arith.addf %7, %9 : vector<16x1xf32>
    %c0_6 = arith.constant 0 : index
    %c0_7 = arith.constant 0 : index
    %11 = vector.load %arg3[%c0_6, %c0_7] : memref<16x1xf32, #tpu.memory_space<vmem>>, vector<16x1xf32>
    tpu.vector_store %arg3[%c0_6, %c0_7], %10 {strides = array<i32>} : memref<16x1xf32, #tpu.memory_space<vmem>>, vector<16x1xf32>,
    %c0_8 = arith.constant 0 : index
    %c0_9 = arith.constant 0 : index
    %12 = vector.load %arg4[%c0_8, %c0_9] : memref<16x1xf32, #tpu.memory_space<vmem>>, vector<16x1xf32>
    %13 = arith.mulf %6, %6 : vector<16x256xf32>
    %cst_10 = arith.constant dense<0.000000e+00> : vector<16xf32>
    %14 = vector.multi_reduction <add>, %13, %cst_10 [1] : vector<16x256xf32> to vector<16xf32>
    %15 = vector.shape_cast %14 : vector<16xf32> to vector<16x1xf32>
    %16 = arith.addf %12, %15 : vector<16x1xf32>
    %c0_11 = arith.constant 0 : index
    %c0_12 = arith.constant 0 : index
    %17 = vector.load %arg4[%c0_11, %c0_12] : memref<16x1xf32, #tpu.memory_space<vmem>>, vector<16x1xf32>
    tpu.vector_store %arg4[%c0_11, %c0_12], %16 {strides = array<i32>} : memref<16x1xf32, #tpu.memory_space<vmem>>, vector<16x1xf32>,
    return
  }
  func.func @transform_0(%arg0: i32, %arg1: i32) -> (i32, i32, i32) {
    %c0_i32 = arith.constant 0 : i32
    %c0_i32_0 = arith.constant 0 : i32
    return %arg0, %c0_i32, %arg1 : i32, i32, i32
  }
  func.func @transform_1(%arg0: i32, %arg1: i32) -> (i32, i32) {
    %c0_i32 = arith.constant 0 : i32
    %c0_i32_0 = arith.constant 0 : i32
    %c0_i32_1 = arith.constant 0 : i32
    return %c0_i32, %c0_i32_0 : i32, i32
  }
  func.func @transform_2(%arg0: i32, %arg1: i32) -> (i32, i32) {
    %c0_i32 = arith.constant 0 : i32
    %c0_i32_0 = arith.constant 0 : i32
    %c0_i32_1 = arith.constant 0 : i32
    return %c0_i32, %c0_i32_0 : i32, i32
  }
}

module attributes {stable_mosaic.version = 11 : i64} {
  func.func @_conv1x1_stats_kernel(%arg0: i32, %arg1: i32, %arg2: memref<1x16x256xf32, #tpu.memory_space<vmem>>, %arg3: memref<4x16xf32, #tpu.memory_space<vmem>>, %arg4: memref<4x1xf32, #tpu.memory_space<vmem>>, %arg5: memref<1x4x256xf32, #tpu.memory_space<vmem>>, %arg6: memref<4x1xf32, #tpu.memory_space<vmem>>, %arg7: memref<4x1xf32, #tpu.memory_space<vmem>>) attributes {dimension_semantics = [#tpu.dimension_semantics<arbitrary>, #tpu.dimension_semantics<arbitrary>], iteration_bounds = array<i64: 2, 1>, scalar_prefetch = 0 : i64, scratch_operands = 0 : i64, tpu.core_type = #tpu.core_type<tc>, window_params = [{transform_indices = @transform_0, window_bounds = array<i64: 1, 16, 256>}, {pipeline_mode = #tpu.pipeline_mode<synchronous>, transform_indices = @transform_1, window_bounds = array<i64: 4, 16>}, {pipeline_mode = #tpu.pipeline_mode<synchronous>, transform_indices = @transform_2, window_bounds = array<i64: 4, 1>}, {transform_indices = @transform_3, window_bounds = array<i64: 1, 4, 256>}, {pipeline_mode = #tpu.pipeline_mode<synchronous>, transform_indices = @transform_4, window_bounds = array<i64: 4, 1>}, {pipeline_mode = #tpu.pipeline_mode<synchronous>, transform_indices = @transform_5, window_bounds = array<i64: 4, 1>}]} {
    %c0_i32 = arith.constant 0 : i32
    %0 = arith.cmpi eq, %arg0, %c0_i32 : i32
    %c0_i32_0 = arith.constant 0 : i32
    %1 = arith.cmpi eq, %arg1, %c0_i32_0 : i32
    %2 = arith.andi %0, %1 : i1
    %3 = arith.extui %2 : i1 to i32
    %c0_i32_1 = arith.constant 0 : i32
    %4 = arith.cmpi ne, %3, %c0_i32_1 : i32
    scf.if %4 {
      %cst_21 = arith.constant 0.000000e+00 : f32
      %26 = vector.broadcast %cst_21 : f32 to vector<4x1xf32>
      %c0_22 = arith.constant 0 : index
      %c0_23 = arith.constant 0 : index
      %27 = vector.load %arg6[%c0_22, %c0_23] : memref<4x1xf32, #tpu.memory_space<vmem>>, vector<4x1xf32>
      tpu.vector_store %arg6[%c0_22, %c0_23], %26 {strides = array<i32>} : memref<4x1xf32, #tpu.memory_space<vmem>>, vector<4x1xf32>,
      %cst_24 = arith.constant 0.000000e+00 : f32
      %28 = vector.broadcast %cst_24 : f32 to vector<4x1xf32>
      %c0_25 = arith.constant 0 : index
      %c0_26 = arith.constant 0 : index
      %29 = vector.load %arg7[%c0_25, %c0_26] : memref<4x1xf32, #tpu.memory_space<vmem>>, vector<4x1xf32>
      tpu.vector_store %arg7[%c0_25, %c0_26], %28 {strides = array<i32>} : memref<4x1xf32, #tpu.memory_space<vmem>>, vector<4x1xf32>,
    } else {
    }
    %c0 = arith.constant 0 : index
    %c0_2 = arith.constant 0 : index
    %c0_3 = arith.constant 0 : index
    %5 = vector.load %arg2[%c0, %c0_2, %c0_3] : memref<1x16x256xf32, #tpu.memory_space<vmem>>, vector<1x16x256xf32>
    %6 = vector.shape_cast %5 : vector<1x16x256xf32> to vector<16x256xf32>
    %c0_4 = arith.constant 0 : index
    %c0_5 = arith.constant 0 : index
    %7 = vector.load %arg3[%c0_4, %c0_5] : memref<4x16xf32, #tpu.memory_space<vmem>>, vector<4x16xf32>
    %cst = arith.constant dense<0.000000e+00> : vector<4x256xf32>
    %8 = tpu.matmul %7, %6, %cst {dimension_numbers = #tpu.dot_dimension_numbers<[1], [0], [0], [1], [0, 0, 1, 1], [], []>} : vector<4x16xf32>, vector<16x256xf32>, vector<4x256xf32> -> vector<4x256xf32>
    %c0_6 = arith.constant 0 : index
    %c0_7 = arith.constant 0 : index
    %9 = vector.load %arg4[%c0_6, %c0_7] : memref<4x1xf32, #tpu.memory_space<vmem>>, vector<4x1xf32>
    %10 = vector.broadcast %9 : vector<4x1xf32> to vector<4x256xf32>
    %11 = arith.addf %8, %10 : vector<4x256xf32>
    %c0_8 = arith.constant 0 : index
    %c0_9 = arith.constant 0 : index
    %c0_10 = arith.constant 0 : index
    %12 = vector.load %arg5[%c0_8, %c0_9, %c0_10] : memref<1x4x256xf32, #tpu.memory_space<vmem>>, vector<1x4x256xf32>
    %13 = vector.shape_cast %12 : vector<1x4x256xf32> to vector<4x256xf32>
    %14 = vector.shape_cast %11 : vector<4x256xf32> to vector<1x4x256xf32>
    tpu.vector_store %arg5[%c0_8, %c0_9, %c0_10], %14 {strides = array<i32>} : memref<1x4x256xf32, #tpu.memory_space<vmem>>, vector<1x4x256xf32>,
    %c0_11 = arith.constant 0 : index
    %c0_12 = arith.constant 0 : index
    %15 = vector.load %arg6[%c0_11, %c0_12] : memref<4x1xf32, #tpu.memory_space<vmem>>, vector<4x1xf32>
    %cst_13 = arith.constant dense<0.000000e+00> : vector<4xf32>
    %16 = vector.multi_reduction <add>, %11, %cst_13 [1] : vector<4x256xf32> to vector<4xf32>
    %17 = vector.shape_cast %16 : vector<4xf32> to vector<4x1xf32>
    %18 = arith.addf %15, %17 : vector<4x1xf32>
    %c0_14 = arith.constant 0 : index
    %c0_15 = arith.constant 0 : index
    %19 = vector.load %arg6[%c0_14, %c0_15] : memref<4x1xf32, #tpu.memory_space<vmem>>, vector<4x1xf32>
    tpu.vector_store %arg6[%c0_14, %c0_15], %18 {strides = array<i32>} : memref<4x1xf32, #tpu.memory_space<vmem>>, vector<4x1xf32>,
    %c0_16 = arith.constant 0 : index
    %c0_17 = arith.constant 0 : index
    %20 = vector.load %arg7[%c0_16, %c0_17] : memref<4x1xf32, #tpu.memory_space<vmem>>, vector<4x1xf32>
    %21 = arith.mulf %11, %11 : vector<4x256xf32>
    %cst_18 = arith.constant dense<0.000000e+00> : vector<4xf32>
    %22 = vector.multi_reduction <add>, %21, %cst_18 [1] : vector<4x256xf32> to vector<4xf32>
    %23 = vector.shape_cast %22 : vector<4xf32> to vector<4x1xf32>
    %24 = arith.addf %20, %23 : vector<4x1xf32>
    %c0_19 = arith.constant 0 : index
    %c0_20 = arith.constant 0 : index
    %25 = vector.load %arg7[%c0_19, %c0_20] : memref<4x1xf32, #tpu.memory_space<vmem>>, vector<4x1xf32>
    tpu.vector_store %arg7[%c0_19, %c0_20], %24 {strides = array<i32>} : memref<4x1xf32, #tpu.memory_space<vmem>>, vector<4x1xf32>,
    return
  }
  func.func @transform_0(%arg0: i32, %arg1: i32) -> (i32, i32, i32) {
    %c0_i32 = arith.constant 0 : i32
    %c0_i32_0 = arith.constant 0 : i32
    return %arg0, %c0_i32, %arg1 : i32, i32, i32
  }
  func.func @transform_1(%arg0: i32, %arg1: i32) -> (i32, i32) {
    %c0_i32 = arith.constant 0 : i32
    %c0_i32_0 = arith.constant 0 : i32
    %c0_i32_1 = arith.constant 0 : i32
    return %c0_i32, %c0_i32_0 : i32, i32
  }
  func.func @transform_2(%arg0: i32, %arg1: i32) -> (i32, i32) {
    %c0_i32 = arith.constant 0 : i32
    %c0_i32_0 = arith.constant 0 : i32
    %c0_i32_1 = arith.constant 0 : i32
    return %c0_i32, %c0_i32_0 : i32, i32
  }
  func.func @transform_3(%arg0: i32, %arg1: i32) -> (i32, i32, i32) {
    %c0_i32 = arith.constant 0 : i32
    %c0_i32_0 = arith.constant 0 : i32
    return %arg0, %c0_i32, %arg1 : i32, i32, i32
  }
  func.func @transform_4(%arg0: i32, %arg1: i32) -> (i32, i32) {
    %c0_i32 = arith.constant 0 : i32
    %c0_i32_0 = arith.constant 0 : i32
    %c0_i32_1 = arith.constant 0 : i32
    return %c0_i32, %c0_i32_0 : i32, i32
  }
  func.func @transform_5(%arg0: i32, %arg1: i32) -> (i32, i32) {
    %c0_i32 = arith.constant 0 : i32
    %c0_i32_0 = arith.constant 0 : i32
    %c0_i32_1 = arith.constant 0 : i32
    return %c0_i32, %c0_i32_0 : i32, i32
  }
}

module attributes {stable_mosaic.version = 11 : i64} {
  func.func @_conv3x3_kernel(%arg0: i32, %arg1: memref<1x4x256xf32, #tpu.memory_space<vmem>>, %arg2: memref<4x1xf32, #tpu.memory_space<vmem>>, %arg3: memref<4x1xf32, #tpu.memory_space<vmem>>, %arg4: memref<9x4x4xf32, #tpu.memory_space<vmem>>, %arg5: memref<1x4x256xf32, #tpu.memory_space<vmem>>, %arg6: memref<4x1xf32, #tpu.memory_space<vmem>>, %arg7: memref<4x4xf32, #tpu.memory_space<vmem>>) attributes {dimension_semantics = [#tpu.dimension_semantics<arbitrary>], iteration_bounds = array<i64: 2>, scalar_prefetch = 0 : i64, scratch_operands = 0 : i64, tpu.core_type = #tpu.core_type<tc>, window_params = [{transform_indices = @transform_0, window_bounds = array<i64: 1, 4, 256>}, {pipeline_mode = #tpu.pipeline_mode<synchronous>, transform_indices = @transform_1, window_bounds = array<i64: 4, 1>}, {pipeline_mode = #tpu.pipeline_mode<synchronous>, transform_indices = @transform_2, window_bounds = array<i64: 4, 1>}, {pipeline_mode = #tpu.pipeline_mode<synchronous>, transform_indices = @transform_3, window_bounds = array<i64: 9, 4, 4>}, {transform_indices = @transform_4, window_bounds = array<i64: 1, 4, 256>}, {pipeline_mode = #tpu.pipeline_mode<synchronous>, transform_indices = @transform_5, window_bounds = array<i64: 4, 1>}, {pipeline_mode = #tpu.pipeline_mode<synchronous>, transform_indices = @transform_6, window_bounds = array<i64: 4, 4>}]} {
    %c0_i32 = arith.constant 0 : i32
    %0 = arith.cmpi eq, %arg0, %c0_i32 : i32
    %1 = arith.extui %0 : i1 to i32
    %c0_i32_0 = arith.constant 0 : i32
    %2 = arith.cmpi ne, %1, %c0_i32_0 : i32
    scf.if %2 {
      %cst_64 = arith.constant 0.000000e+00 : f32
      %124 = vector.broadcast %cst_64 : f32 to vector<4x1xf32>
      %c0_65 = arith.constant 0 : index
      %c0_66 = arith.constant 0 : index
      %125 = vector.load %arg6[%c0_65, %c0_66] : memref<4x1xf32, #tpu.memory_space<vmem>>, vector<4x1xf32>
      tpu.vector_store %arg6[%c0_65, %c0_66], %124 {strides = array<i32>} : memref<4x1xf32, #tpu.memory_space<vmem>>, vector<4x1xf32>,
      %cst_67 = arith.constant 0.000000e+00 : f32
      %126 = vector.broadcast %cst_67 : f32 to vector<4x4xf32>
      %c0_68 = arith.constant 0 : index
      %c0_69 = arith.constant 0 : index
      %127 = vector.load %arg7[%c0_68, %c0_69] : memref<4x4xf32, #tpu.memory_space<vmem>>, vector<4x4xf32>
      tpu.vector_store %arg7[%c0_68, %c0_69], %126 {strides = array<i32>} : memref<4x4xf32, #tpu.memory_space<vmem>>, vector<4x4xf32>,
    } else {
    }
    %c0 = arith.constant 0 : index
    %c0_1 = arith.constant 0 : index
    %c0_2 = arith.constant 0 : index
    %3 = vector.load %arg1[%c0, %c0_1, %c0_2] : memref<1x4x256xf32, #tpu.memory_space<vmem>>, vector<1x4x256xf32>
    %4 = vector.shape_cast %3 : vector<1x4x256xf32> to vector<4x256xf32>
    %c0_3 = arith.constant 0 : index
    %c0_4 = arith.constant 0 : index
    %5 = vector.load %arg2[%c0_3, %c0_4] : memref<4x1xf32, #tpu.memory_space<vmem>>, vector<4x1xf32>
    %6 = vector.broadcast %5 : vector<4x1xf32> to vector<4x256xf32>
    %7 = arith.mulf %4, %6 : vector<4x256xf32>
    %c0_5 = arith.constant 0 : index
    %c0_6 = arith.constant 0 : index
    %8 = vector.load %arg3[%c0_5, %c0_6] : memref<4x1xf32, #tpu.memory_space<vmem>>, vector<4x1xf32>
    %9 = vector.broadcast %8 : vector<4x1xf32> to vector<4x256xf32>
    %10 = arith.addf %7, %9 : vector<4x256xf32>
    %cst = arith.constant 0.000000e+00 : f32
    %11 = vector.broadcast %cst : f32 to vector<4x17xf32>
    %12 = tpu.concatenate %11, %10, %11 in 1 : vector<4x17xf32>, vector<4x256xf32>, vector<4x17xf32> -> vector<4x290xf32>
    %13 = tpu.iota {dimensions = array<i32: 1>} : vector<1x256xi32>
    %c16_i32 = arith.constant 16 : i32
    %c0_i32_7 = arith.constant 0 : i32
    %14 = arith.cmpi eq, %c16_i32, %c0_i32_7 : i32
    %c1_i32 = arith.constant 1 : i32
    %15 = arith.select %14, %c1_i32, %c16_i32 : i32
    %16 = vector.broadcast %15 : i32 to vector<1x256xi32>
    %17 = arith.remsi %13, %16 : vector<1x256xi32>
    %c0_i32_8 = arith.constant 0 : i32
    %18 = vector.broadcast %c0_i32_8 : i32 to vector<1x256xi32>
    %19 = arith.cmpi ne, %17, %18 : vector<1x256xi32>
    %c0_i32_9 = arith.constant 0 : i32
    %20 = vector.broadcast %c0_i32_9 : i32 to vector<1x256xi32>
    %21 = arith.cmpi slt, %17, %20 : vector<1x256xi32>
    %c0_i32_10 = arith.constant 0 : i32
    %22 = arith.cmpi slt, %15, %c0_i32_10 : i32
    %23 = vector.broadcast %22 : i1 to vector<1x256xi1>
    %24 = vector.broadcast %23 : vector<1x256xi1> to vector<1x256xi1>
    %25 = arith.xori %21, %24 : vector<1x256xi1>
    %26 = arith.andi %25, %19 : vector<1x256xi1>
    %27 = vector.broadcast %15 : i32 to vector<1x256xi32>
    %28 = arith.addi %17, %27 : vector<1x256xi32>
    %29 = arith.select %26, %28, %17 : vector<1x256xi1>, vector<1x256xi32>
    %cst_11 = arith.constant 0.000000e+00 : f32
    %30 = vector.broadcast %cst_11 : f32 to vector<4x256xf32>
    %31 = vector.extract_strided_slice %12 {offsets = [0, 0], sizes = [4, 256], strides = [1, 1]} : vector<4x290xf32> to vector<4x256xf32>
    %c1_i32_12 = arith.constant 1 : i32
    %32 = vector.broadcast %c1_i32_12 : i32 to vector<1x256xi32>
    %33 = arith.cmpi sge, %29, %32 : vector<1x256xi32>
    %cst_13 = arith.constant 0.000000e+00 : f32
    %34 = vector.shape_cast %33 : vector<1x256xi1> to vector<1x256xi1>
    %35 = vector.broadcast %34 : vector<1x256xi1> to vector<4x256xi1>
    %36 = vector.broadcast %cst_13 : f32 to vector<4x256xf32>
    %37 = arith.select %35, %31, %36 : vector<4x256xi1>, vector<4x256xf32>
    %c0_14 = arith.constant 0 : index
    %c0_15 = arith.constant 0 : index
    %c0_16 = arith.constant 0 : index
    %38 = vector.load %arg4[%c0_14, %c0_15, %c0_16] : memref<9x4x4xf32, #tpu.memory_space<vmem>>, vector<1x4x4xf32>
    %39 = vector.shape_cast %38 : vector<1x4x4xf32> to vector<4x4xf32>
    %cst_17 = arith.constant dense<0.000000e+00> : vector<4x256xf32>
    %40 = tpu.matmul %39, %37, %cst_17 {dimension_numbers = #tpu.dot_dimension_numbers<[1], [0], [0], [1], [0, 0, 1, 1], [], []>} : vector<4x4xf32>, vector<4x256xf32>, vector<4x256xf32> -> vector<4x256xf32>
    %41 = arith.addf %30, %40 : vector<4x256xf32>
    %42 = vector.extract_strided_slice %12 {offsets = [0, 1], sizes = [4, 256], strides = [1, 1]} : vector<4x290xf32> to vector<4x256xf32>
    %c1 = arith.constant 1 : index
    %c0_18 = arith.constant 0 : index
    %c0_19 = arith.constant 0 : index
    %43 = vector.load %arg4[%c1, %c0_18, %c0_19] : memref<9x4x4xf32, #tpu.memory_space<vmem>>, vector<1x4x4xf32>
    %44 = vector.shape_cast %43 : vector<1x4x4xf32> to vector<4x4xf32>
    %cst_20 = arith.constant dense<0.000000e+00> : vector<4x256xf32>
    %45 = tpu.matmul %44, %42, %cst_20 {dimension_numbers = #tpu.dot_dimension_numbers<[1], [0], [0], [1], [0, 0, 1, 1], [], []>} : vector<4x4xf32>, vector<4x256xf32>, vector<4x256xf32> -> vector<4x256xf32>
    %46 = arith.addf %41, %45 : vector<4x256xf32>
    %47 = vector.extract_strided_slice %12 {offsets = [0, 2], sizes = [4, 256], strides = [1, 1]} : vector<4x290xf32> to vector<4x256xf32>
    %c14_i32 = arith.constant 14 : i32
    %48 = vector.broadcast %c14_i32 : i32 to vector<1x256xi32>
    %49 = arith.cmpi sle, %29, %48 : vector<1x256xi32>
    %cst_21 = arith.constant 0.000000e+00 : f32
    %50 = vector.shape_cast %49 : vector<1x256xi1> to vector<1x256xi1>
    %51 = vector.broadcast %50 : vector<1x256xi1> to vector<4x256xi1>
    %52 = vector.broadcast %cst_21 : f32 to vector<4x256xf32>
    %53 = arith.select %51, %47, %52 : vector<4x256xi1>, vector<4x256xf32>
    %c2 = arith.constant 2 : index
    %c0_22 = arith.constant 0 : index
    %c0_23 = arith.constant 0 : index
    %54 = vector.load %arg4[%c2, %c0_22, %c0_23] : memref<9x4x4xf32, #tpu.memory_space<vmem>>, vector<1x4x4xf32>
    %55 = vector.shape_cast %54 : vector<1x4x4xf32> to vector<4x4xf32>
    %cst_24 = arith.constant dense<0.000000e+00> : vector<4x256xf32>
    %56 = tpu.matmul %55, %53, %cst_24 {dimension_numbers = #tpu.dot_dimension_numbers<[1], [0], [0], [1], [0, 0, 1, 1], [], []>} : vector<4x4xf32>, vector<4x256xf32>, vector<4x256xf32> -> vector<4x256xf32>
    %57 = arith.addf %46, %56 : vector<4x256xf32>
    %58 = vector.extract_strided_slice %12 {offsets = [0, 16], sizes = [4, 256], strides = [1, 1]} : vector<4x290xf32> to vector<4x256xf32>
    %c1_i32_25 = arith.constant 1 : i32
    %59 = vector.broadcast %c1_i32_25 : i32 to vector<1x256xi32>
    %60 = arith.cmpi sge, %29, %59 : vector<1x256xi32>
    %cst_26 = arith.constant 0.000000e+00 : f32
    %61 = vector.shape_cast %60 : vector<1x256xi1> to vector<1x256xi1>
    %62 = vector.broadcast %61 : vector<1x256xi1> to vector<4x256xi1>
    %63 = vector.broadcast %cst_26 : f32 to vector<4x256xf32>
    %64 = arith.select %62, %58, %63 : vector<4x256xi1>, vector<4x256xf32>
    %c3 = arith.constant 3 : index
    %c0_27 = arith.constant 0 : index
    %c0_28 = arith.constant 0 : index
    %65 = vector.load %arg4[%c3, %c0_27, %c0_28] : memref<9x4x4xf32, #tpu.memory_space<vmem>>, vector<1x4x4xf32>
    %66 = vector.shape_cast %65 : vector<1x4x4xf32> to vector<4x4xf32>
    %cst_29 = arith.constant dense<0.000000e+00> : vector<4x256xf32>
    %67 = tpu.matmul %66, %64, %cst_29 {dimension_numbers = #tpu.dot_dimension_numbers<[1], [0], [0], [1], [0, 0, 1, 1], [], []>} : vector<4x4xf32>, vector<4x256xf32>, vector<4x256xf32> -> vector<4x256xf32>
    %68 = arith.addf %57, %67 : vector<4x256xf32>
    %69 = vector.extract_strided_slice %12 {offsets = [0, 17], sizes = [4, 256], strides = [1, 1]} : vector<4x290xf32> to vector<4x256xf32>
    %c4 = arith.constant 4 : index
    %c0_30 = arith.constant 0 : index
    %c0_31 = arith.constant 0 : index
    %70 = vector.load %arg4[%c4, %c0_30, %c0_31] : memref<9x4x4xf32, #tpu.memory_space<vmem>>, vector<1x4x4xf32>
    %71 = vector.shape_cast %70 : vector<1x4x4xf32> to vector<4x4xf32>
    %cst_32 = arith.constant dense<0.000000e+00> : vector<4x256xf32>
    %72 = tpu.matmul %71, %69, %cst_32 {dimension_numbers = #tpu.dot_dimension_numbers<[1], [0], [0], [1], [0, 0, 1, 1], [], []>} : vector<4x4xf32>, vector<4x256xf32>, vector<4x256xf32> -> vector<4x256xf32>
    %73 = arith.addf %68, %72 : vector<4x256xf32>
    %74 = vector.extract_strided_slice %12 {offsets = [0, 18], sizes = [4, 256], strides = [1, 1]} : vector<4x290xf32> to vector<4x256xf32>
    %c14_i32_33 = arith.constant 14 : i32
    %75 = vector.broadcast %c14_i32_33 : i32 to vector<1x256xi32>
    %76 = arith.cmpi sle, %29, %75 : vector<1x256xi32>
    %cst_34 = arith.constant 0.000000e+00 : f32
    %77 = vector.shape_cast %76 : vector<1x256xi1> to vector<1x256xi1>
    %78 = vector.broadcast %77 : vector<1x256xi1> to vector<4x256xi1>
    %79 = vector.broadcast %cst_34 : f32 to vector<4x256xf32>
    %80 = arith.select %78, %74, %79 : vector<4x256xi1>, vector<4x256xf32>
    %c5 = arith.constant 5 : index
    %c0_35 = arith.constant 0 : index
    %c0_36 = arith.constant 0 : index
    %81 = vector.load %arg4[%c5, %c0_35, %c0_36] : memref<9x4x4xf32, #tpu.memory_space<vmem>>, vector<1x4x4xf32>
    %82 = vector.shape_cast %81 : vector<1x4x4xf32> to vector<4x4xf32>
    %cst_37 = arith.constant dense<0.000000e+00> : vector<4x256xf32>
    %83 = tpu.matmul %82, %80, %cst_37 {dimension_numbers = #tpu.dot_dimension_numbers<[1], [0], [0], [1], [0, 0, 1, 1], [], []>} : vector<4x4xf32>, vector<4x256xf32>, vector<4x256xf32> -> vector<4x256xf32>
    %84 = arith.addf %73, %83 : vector<4x256xf32>
    %85 = vector.extract_strided_slice %12 {offsets = [0, 32], sizes = [4, 256], strides = [1, 1]} : vector<4x290xf32> to vector<4x256xf32>
    %c1_i32_38 = arith.constant 1 : i32
    %86 = vector.broadcast %c1_i32_38 : i32 to vector<1x256xi32>
    %87 = arith.cmpi sge, %29, %86 : vector<1x256xi32>
    %cst_39 = arith.constant 0.000000e+00 : f32
    %88 = vector.shape_cast %87 : vector<1x256xi1> to vector<1x256xi1>
    %89 = vector.broadcast %88 : vector<1x256xi1> to vector<4x256xi1>
    %90 = vector.broadcast %cst_39 : f32 to vector<4x256xf32>
    %91 = arith.select %89, %85, %90 : vector<4x256xi1>, vector<4x256xf32>
    %c6 = arith.constant 6 : index
    %c0_40 = arith.constant 0 : index
    %c0_41 = arith.constant 0 : index
    %92 = vector.load %arg4[%c6, %c0_40, %c0_41] : memref<9x4x4xf32, #tpu.memory_space<vmem>>, vector<1x4x4xf32>
    %93 = vector.shape_cast %92 : vector<1x4x4xf32> to vector<4x4xf32>
    %cst_42 = arith.constant dense<0.000000e+00> : vector<4x256xf32>
    %94 = tpu.matmul %93, %91, %cst_42 {dimension_numbers = #tpu.dot_dimension_numbers<[1], [0], [0], [1], [0, 0, 1, 1], [], []>} : vector<4x4xf32>, vector<4x256xf32>, vector<4x256xf32> -> vector<4x256xf32>
    %95 = arith.addf %84, %94 : vector<4x256xf32>
    %96 = vector.extract_strided_slice %12 {offsets = [0, 33], sizes = [4, 256], strides = [1, 1]} : vector<4x290xf32> to vector<4x256xf32>
    %c7 = arith.constant 7 : index
    %c0_43 = arith.constant 0 : index
    %c0_44 = arith.constant 0 : index
    %97 = vector.load %arg4[%c7, %c0_43, %c0_44] : memref<9x4x4xf32, #tpu.memory_space<vmem>>, vector<1x4x4xf32>
    %98 = vector.shape_cast %97 : vector<1x4x4xf32> to vector<4x4xf32>
    %cst_45 = arith.constant dense<0.000000e+00> : vector<4x256xf32>
    %99 = tpu.matmul %98, %96, %cst_45 {dimension_numbers = #tpu.dot_dimension_numbers<[1], [0], [0], [1], [0, 0, 1, 1], [], []>} : vector<4x4xf32>, vector<4x256xf32>, vector<4x256xf32> -> vector<4x256xf32>
    %100 = arith.addf %95, %99 : vector<4x256xf32>
    %101 = vector.extract_strided_slice %12 {offsets = [0, 34], sizes = [4, 256], strides = [1, 1]} : vector<4x290xf32> to vector<4x256xf32>
    %c14_i32_46 = arith.constant 14 : i32
    %102 = vector.broadcast %c14_i32_46 : i32 to vector<1x256xi32>
    %103 = arith.cmpi sle, %29, %102 : vector<1x256xi32>
    %cst_47 = arith.constant 0.000000e+00 : f32
    %104 = vector.shape_cast %103 : vector<1x256xi1> to vector<1x256xi1>
    %105 = vector.broadcast %104 : vector<1x256xi1> to vector<4x256xi1>
    %106 = vector.broadcast %cst_47 : f32 to vector<4x256xf32>
    %107 = arith.select %105, %101, %106 : vector<4x256xi1>, vector<4x256xf32>
    %c8 = arith.constant 8 : index
    %c0_48 = arith.constant 0 : index
    %c0_49 = arith.constant 0 : index
    %108 = vector.load %arg4[%c8, %c0_48, %c0_49] : memref<9x4x4xf32, #tpu.memory_space<vmem>>, vector<1x4x4xf32>
    %109 = vector.shape_cast %108 : vector<1x4x4xf32> to vector<4x4xf32>
    %cst_50 = arith.constant dense<0.000000e+00> : vector<4x256xf32>
    %110 = tpu.matmul %109, %107, %cst_50 {dimension_numbers = #tpu.dot_dimension_numbers<[1], [0], [0], [1], [0, 0, 1, 1], [], []>} : vector<4x4xf32>, vector<4x256xf32>, vector<4x256xf32> -> vector<4x256xf32>
    %111 = arith.addf %100, %110 : vector<4x256xf32>
    %c0_51 = arith.constant 0 : index
    %c0_52 = arith.constant 0 : index
    %c0_53 = arith.constant 0 : index
    %112 = vector.load %arg5[%c0_51, %c0_52, %c0_53] : memref<1x4x256xf32, #tpu.memory_space<vmem>>, vector<1x4x256xf32>
    %113 = vector.shape_cast %112 : vector<1x4x256xf32> to vector<4x256xf32>
    %114 = vector.shape_cast %111 : vector<4x256xf32> to vector<1x4x256xf32>
    tpu.vector_store %arg5[%c0_51, %c0_52, %c0_53], %114 {strides = array<i32>} : memref<1x4x256xf32, #tpu.memory_space<vmem>>, vector<1x4x256xf32>,
    %c0_54 = arith.constant 0 : index
    %c0_55 = arith.constant 0 : index
    %115 = vector.load %arg6[%c0_54, %c0_55] : memref<4x1xf32, #tpu.memory_space<vmem>>, vector<4x1xf32>
    %cst_56 = arith.constant dense<0.000000e+00> : vector<4xf32>
    %116 = vector.multi_reduction <add>, %111, %cst_56 [1] : vector<4x256xf32> to vector<4xf32>
    %117 = vector.shape_cast %116 : vector<4xf32> to vector<4x1xf32>
    %118 = arith.addf %115, %117 : vector<4x1xf32>
    %c0_57 = arith.constant 0 : index
    %c0_58 = arith.constant 0 : index
    %119 = vector.load %arg6[%c0_57, %c0_58] : memref<4x1xf32, #tpu.memory_space<vmem>>, vector<4x1xf32>
    tpu.vector_store %arg6[%c0_57, %c0_58], %118 {strides = array<i32>} : memref<4x1xf32, #tpu.memory_space<vmem>>, vector<4x1xf32>,
    %c0_59 = arith.constant 0 : index
    %c0_60 = arith.constant 0 : index
    %120 = vector.load %arg7[%c0_59, %c0_60] : memref<4x4xf32, #tpu.memory_space<vmem>>, vector<4x4xf32>
    %cst_61 = arith.constant dense<0.000000e+00> : vector<4x4xf32>
    %121 = tpu.matmul %111, %111, %cst_61 {dimension_numbers = #tpu.dot_dimension_numbers<[1], [1], [0], [0], [0, 0, 1, 0], [], []>} : vector<4x256xf32>, vector<4x256xf32>, vector<4x4xf32> -> vector<4x4xf32>
    %122 = arith.addf %120, %121 : vector<4x4xf32>
    %c0_62 = arith.constant 0 : index
    %c0_63 = arith.constant 0 : index
    %123 = vector.load %arg7[%c0_62, %c0_63] : memref<4x4xf32, #tpu.memory_space<vmem>>, vector<4x4xf32>
    tpu.vector_store %arg7[%c0_62, %c0_63], %122 {strides = array<i32>} : memref<4x4xf32, #tpu.memory_space<vmem>>, vector<4x4xf32>,
    return
  }
  func.func @transform_0(%arg0: i32) -> (i32, i32, i32) {
    %c0_i32 = arith.constant 0 : i32
    %c0_i32_0 = arith.constant 0 : i32
    %c0_i32_1 = arith.constant 0 : i32
    return %arg0, %c0_i32, %c0_i32_0 : i32, i32, i32
  }
  func.func @transform_1(%arg0: i32) -> (i32, i32) {
    %c0_i32 = arith.constant 0 : i32
    %c0_i32_0 = arith.constant 0 : i32
    %c0_i32_1 = arith.constant 0 : i32
    return %c0_i32, %c0_i32_0 : i32, i32
  }
  func.func @transform_2(%arg0: i32) -> (i32, i32) {
    %c0_i32 = arith.constant 0 : i32
    %c0_i32_0 = arith.constant 0 : i32
    %c0_i32_1 = arith.constant 0 : i32
    return %c0_i32, %c0_i32_0 : i32, i32
  }
  func.func @transform_3(%arg0: i32) -> (i32, i32, i32) {
    %c0_i32 = arith.constant 0 : i32
    %c0_i32_0 = arith.constant 0 : i32
    %c0_i32_1 = arith.constant 0 : i32
    %c0_i32_2 = arith.constant 0 : i32
    return %c0_i32, %c0_i32_0, %c0_i32_1 : i32, i32, i32
  }
  func.func @transform_4(%arg0: i32) -> (i32, i32, i32) {
    %c0_i32 = arith.constant 0 : i32
    %c0_i32_0 = arith.constant 0 : i32
    %c0_i32_1 = arith.constant 0 : i32
    return %arg0, %c0_i32, %c0_i32_0 : i32, i32, i32
  }
  func.func @transform_5(%arg0: i32) -> (i32, i32) {
    %c0_i32 = arith.constant 0 : i32
    %c0_i32_0 = arith.constant 0 : i32
    %c0_i32_1 = arith.constant 0 : i32
    return %c0_i32, %c0_i32_0 : i32, i32
  }
  func.func @transform_6(%arg0: i32) -> (i32, i32) {
    %c0_i32 = arith.constant 0 : i32
    %c0_i32_0 = arith.constant 0 : i32
    %c0_i32_1 = arith.constant 0 : i32
    return %c0_i32, %c0_i32_0 : i32, i32
  }
}

module attributes {stable_mosaic.version = 11 : i64} {
  func.func @_conv1x1_residual_kernel(%arg0: i32, %arg1: i32, %arg2: memref<1x4x256xf32, #tpu.memory_space<vmem>>, %arg3: memref<1x16x256xf32, #tpu.memory_space<vmem>>, %arg4: memref<16x4xf32, #tpu.memory_space<vmem>>, %arg5: memref<16x1xf32, #tpu.memory_space<vmem>>, %arg6: memref<1x16x256xf32, #tpu.memory_space<vmem>>) attributes {dimension_semantics = [#tpu.dimension_semantics<parallel>, #tpu.dimension_semantics<parallel>], iteration_bounds = array<i64: 2, 1>, scalar_prefetch = 0 : i64, scratch_operands = 0 : i64, tpu.core_type = #tpu.core_type<tc>, window_params = [{transform_indices = @transform_0, window_bounds = array<i64: 1, 4, 256>}, {transform_indices = @transform_1, window_bounds = array<i64: 1, 16, 256>}, {pipeline_mode = #tpu.pipeline_mode<synchronous>, transform_indices = @transform_2, window_bounds = array<i64: 16, 4>}, {pipeline_mode = #tpu.pipeline_mode<synchronous>, transform_indices = @transform_3, window_bounds = array<i64: 16, 1>}, {transform_indices = @transform_4, window_bounds = array<i64: 1, 16, 256>}]} {
    %c0 = arith.constant 0 : index
    %c0_0 = arith.constant 0 : index
    %c0_1 = arith.constant 0 : index
    %0 = vector.load %arg2[%c0, %c0_0, %c0_1] : memref<1x4x256xf32, #tpu.memory_space<vmem>>, vector<1x4x256xf32>
    %1 = vector.shape_cast %0 : vector<1x4x256xf32> to vector<4x256xf32>
    %c0_2 = arith.constant 0 : index
    %c0_3 = arith.constant 0 : index
    %c0_4 = arith.constant 0 : index
    %2 = vector.load %arg3[%c0_2, %c0_3, %c0_4] : memref<1x16x256xf32, #tpu.memory_space<vmem>>, vector<1x16x256xf32>
    %3 = vector.shape_cast %2 : vector<1x16x256xf32> to vector<16x256xf32>
    %c0_5 = arith.constant 0 : index
    %c0_6 = arith.constant 0 : index
    %4 = vector.load %arg4[%c0_5, %c0_6] : memref<16x4xf32, #tpu.memory_space<vmem>>, vector<16x4xf32>
    %cst = arith.constant dense<0.000000e+00> : vector<16x256xf32>
    %5 = tpu.matmul %4, %1, %cst {dimension_numbers = #tpu.dot_dimension_numbers<[1], [0], [0], [1], [0, 0, 1, 1], [], []>} : vector<16x4xf32>, vector<4x256xf32>, vector<16x256xf32> -> vector<16x256xf32>
    %c0_7 = arith.constant 0 : index
    %c0_8 = arith.constant 0 : index
    %6 = vector.load %arg5[%c0_7, %c0_8] : memref<16x1xf32, #tpu.memory_space<vmem>>, vector<16x1xf32>
    %7 = vector.broadcast %6 : vector<16x1xf32> to vector<16x256xf32>
    %8 = arith.addf %5, %7 : vector<16x256xf32>
    %9 = arith.addf %8, %3 : vector<16x256xf32>
    %c0_9 = arith.constant 0 : index
    %c0_10 = arith.constant 0 : index
    %c0_11 = arith.constant 0 : index
    %10 = vector.load %arg6[%c0_9, %c0_10, %c0_11] : memref<1x16x256xf32, #tpu.memory_space<vmem>>, vector<1x16x256xf32>
    %11 = vector.shape_cast %10 : vector<1x16x256xf32> to vector<16x256xf32>
    %12 = vector.shape_cast %9 : vector<16x256xf32> to vector<1x16x256xf32>
    tpu.vector_store %arg6[%c0_9, %c0_10, %c0_11], %12 {strides = array<i32>} : memref<1x16x256xf32, #tpu.memory_space<vmem>>, vector<1x16x256xf32>,
    return
  }
  func.func @transform_0(%arg0: i32, %arg1: i32) -> (i32, i32, i32) {
    %c0_i32 = arith.constant 0 : i32
    %c0_i32_0 = arith.constant 0 : i32
    return %arg0, %c0_i32, %arg1 : i32, i32, i32
  }
  func.func @transform_1(%arg0: i32, %arg1: i32) -> (i32, i32, i32) {
    %c0_i32 = arith.constant 0 : i32
    %c0_i32_0 = arith.constant 0 : i32
    return %arg0, %c0_i32, %arg1 : i32, i32, i32
  }
  func.func @transform_2(%arg0: i32, %arg1: i32) -> (i32, i32) {
    %c0_i32 = arith.constant 0 : i32
    %c0_i32_0 = arith.constant 0 : i32
    %c0_i32_1 = arith.constant 0 : i32
    return %c0_i32, %c0_i32_0 : i32, i32
  }
  func.func @transform_3(%arg0: i32, %arg1: i32) -> (i32, i32) {
    %c0_i32 = arith.constant 0 : i32
    %c0_i32_0 = arith.constant 0 : i32
    %c0_i32_1 = arith.constant 0 : i32
    return %c0_i32, %c0_i32_0 : i32, i32
  }
  func.func @transform_4(%arg0: i32, %arg1: i32) -> (i32, i32, i32) {
    %c0_i32 = arith.constant 0 : i32
    %c0_i32_0 = arith.constant 0 : i32
    return %arg0, %c0_i32, %arg1 : i32, i32, i32
  }
}

</mosaic_0001>

<llo_original>
// kernel: bottleneck_forward.5
$region0: #{bottleneck_forward.5}
  #allocation0 [shape = 'u32[]', space=smem, size = 0x4, offset = 0x4, fixed_abs, tag = 'smem constant byte address 0x4 - core index']
  #allocation1 [shape = 'u32[144,128]{1,0:T(1,128)}', space=vmem, size = 0x12000, scoped, tag = 'internal scratch']
  %s0 = inlined_call_operand.vmem [shape: f32[2,16,256], index: 0, kind: input, shape index: {}]
  %s1 = inlined_call_operand.vmem [shape: f32[4,16], index: 1, kind: input, shape index: {}]
  %s2 = inlined_call_operand.vmem [shape: f32[4,1], index: 2, kind: input, shape index: {}]
  %s3 = inlined_call_operand.vmem [shape: f32[2,4,256], index: 3, kind: output, shape index: {0}]
  %s4 = inlined_call_operand.vmem [shape: f32[4,1], index: 4, kind: output, shape index: {1}]
  %s5 = inlined_call_operand.vmem [shape: f32[4,1], index: 5, kind: output, shape index: {2}]
  %6 = xla_tuple %s3, %s4, %s5
  %s7 = sld [smem:[#allocation0]]
  $region65: #{bottleneck_forward.5} parent=0
    _
  %s9 = ssub.s32 1, %s7
  %s10 = scalar_select 0, %s9, %s7
  loop: start=0, step=1, limit=4
  $region2: #{bottleneck_forward.5} parent=0 // loop_pre_header
    _
  $region3: #{bottleneck_forward.5} parent=0 // loop_header
    %s12 = sphi 0, %s16
    %p13 = scmp.ge.s32.totalorder %s12, 4
    %s19 = sphi 0, %s31
    %s20 = sphi 0, %s27
    %s21 = sphi 0, %s19
    %s22 = sphi 0, %s20
    %s23 = sphi 0, %s21
    %s24 = sphi 0, %s22
    %s36 = sphi 0, %s38
    %s39 = sphi 0, %s36
    %s40 = sphi 0, %s39
    %s56 = sphi 0, %s40
    %s60 = sphi 0, %s60
    %s62 = sphi 0, %s60
    %s63 = sphi 0, %s62
    %s77 = sphi 0, %s63
    %s81 = sphi 0, %s81
    %s83 = sphi 0, %s81
    %s84 = sphi 0, %s83
    %s98 = sphi 0, %s84
    %s106 = sphi 0, %s108
    %s109 = sphi 0, %s106
    %s110 = sphi 0, %s109
    %s126 = sphi 0, %s110
    %s130 = sphi 0, %s130
    %s132 = sphi 0, %s130
    %s133 = sphi 0, %s132
    %s147 = sphi 0, %s133
    %s151 = sphi 0, %s151
    %s153 = sphi 0, %s151
    %s154 = sphi 0, %s153
    %s168 = sphi 0, %s154
  $region4: #{bottleneck_forward.5} parent=0 // loop_header_branch
    %15 = sbr.rel (%p13) target = $region8
  $region5: #{bottleneck_forward.5} parent=0 // loop_body
    %s17 = ssub.s32 %s12, 1
    %s18 = ssub.s32 %s12, 2
    %s25 = sadd.s32 1, %s20
    %p26 = scmp.ge.s32.totalorder %s25, 1
    %s27 = scalar_select %p26, 0, %s25
    %s28 = sadd.s32 1, %s19
    %s29 = scalar_select %p26, %s28, %s19
    %p30 = scmp.ge.s32.totalorder %s29, 2
    %s31 = scalar_select %p30, 0, %s29
    %s32 = ssub.s32 %s19, %s31
    %s33 = ssub.s32 %s20, %s27
    %s34 = sor.u32 %s32, %s33
    %p35 = scmp.eq.s32.totalorder %s34, 0
    %s37 = sadd.s32 %s36, 1
    %s38 = scalar_select %p35, %s36, %s37
    %p41 = pneg %p35
    %p42 = scmp.eq.s32.totalorder %s12, 1
    %p43 = por %p41, %p42
    %p44 = scmp.ne.s32.totalorder %s36, %s39
    %p45 = scmp.eq.s32.totalorder %s12, 0
    %p46 = por %p44, %p45
    %p47 = scmp.ne.s32.totalorder %s36, %s39
    %p48 = scmp.eq.s32.totalorder %s17, 1
    %p49 = por %p47, %p48
    %p50 = scmp.ne.s32.totalorder %s39, %s40
    %p51 = scmp.eq.s32.totalorder %s17, 0
    %p52 = por %p50, %p51
    %p53 = scmp.ne.s32.totalorder %s39, %s40
    %p54 = scmp.eq.s32.totalorder %s18, 1
    %p55 = por %p53, %p54
    %p57 = scmp.ne.s32.totalorder %s40, %s56
    %p58 = scmp.eq.s32.totalorder %s18, 0
    %p59 = por %p57, %p58
    %s61 = sadd.s32 %s60, 1
    %p64 = scmp.eq.s32.totalorder %s12, 1
    %p65 = scmp.ne.s32.totalorder %s60, %s62
    %p66 = scmp.eq.s32.totalorder %s12, 0
    %p67 = por %p65, %p66
    %p68 = scmp.ne.s32.totalorder %s60, %s62
    %p69 = scmp.eq.s32.totalorder %s17, 1
    %p70 = por %p68, %p69
    %p71 = scmp.ne.s32.totalorder %s62, %s63
    %p72 = scmp.eq.s32.totalorder %s17, 0
    %p73 = por %p71, %p72
    %p74 = scmp.ne.s32.totalorder %s62, %s63
    %p75 = scmp.eq.s32.totalorder %s18, 1
    %p76 = por %p74, %p75
    %p78 = scmp.ne.s32.totalorder %s63, %s77
    %p79 = scmp.eq.s32.totalorder %s18, 0
    %p80 = por %p78, %p79
    %s82 = sadd.s32 %s81, 1
    %p85 = scmp.eq.s32.totalorder %s12, 1
    %p86 = scmp.ne.s32.totalorder %s81, %s83
    %p87 = scmp.eq.s32.totalorder %s12, 0
    %p88 = por %p86, %p87
    %p89 = scmp.ne.s32.totalorder %s81, %s83
    %p90 = scmp.eq.s32.totalorder %s17, 1
    %p91 = por %p89, %p90
    %p92 = scmp.ne.s32.totalorder %s83, %s84
    %p93 = scmp.eq.s32.totalorder %s17, 0
    %p94 = por %p92, %p93
    %p95 = scmp.ne.s32.totalorder %s83, %s84
    %p96 = scmp.eq.s32.totalorder %s18, 1
    %p97 = por %p95, %p96
    %p99 = scmp.ne.s32.totalorder %s84, %s98
    %p100 = scmp.eq.s32.totalorder %s18, 0
    %p101 = por %p99, %p100
    %s102 = ssub.s32 %s19, %s31
    %s103 = ssub.s32 %s20, %s27
    %s104 = sor.u32 %s102, %s103
    %p105 = scmp.eq.s32.totalorder %s104, 0
    %s107 = sadd.s32 %s106, 1
    %s108 = scalar_select %p105, %s106, %s107
    %p111 = pneg %p105
    %p112 = scmp.eq.s32.totalorder %s12, 1
    %p113 = por %p111, %p112
    %p114 = scmp.ne.s32.totalorder %s106, %s109
    %p115 = scmp.eq.s32.totalorder %s12, 0
    %p116 = por %p114, %p115
    %p117 = scmp.ne.s32.totalorder %s106, %s109
    %p118 = scmp.eq.s32.totalorder %s17, 1
    %p119 = por %p117, %p118
    %p120 = scmp.ne.s32.totalorder %s109, %s110
    %p121 = scmp.eq.s32.totalorder %s17, 0
    %p122 = por %p120, %p121
    %p123 = scmp.ne.s32.totalorder %s109, %s110
    %p124 = scmp.eq.s32.totalorder %s18, 1
    %p125 = por %p123, %p124
    %p127 = scmp.ne.s32.totalorder %s110, %s126
    %p128 = scmp.eq.s32.totalorder %s18, 0
    %p129 = por %p127, %p128
    %s131 = sadd.s32 %s130, 1
    %p134 = scmp.eq.s32.totalorder %s12, 1
    %p135 = scmp.ne.s32.totalorder %s130, %s132
    %p136 = scmp.eq.s32.totalorder %s12, 0
    %p137 = por %p135, %p136
    %p138 = scmp.ne.s32.totalorder %s130, %s132
    %p139 = scmp.eq.s32.totalorder %s17, 1
    %p140 = por %p138, %p139
    %p141 = scmp.ne.s32.totalorder %s132, %s133
    %p142 = scmp.eq.s32.totalorder %s17, 0
    %p143 = por %p141, %p142
    %p144 = scmp.ne.s32.totalorder %s132, %s133
    %p145 = scmp.eq.s32.totalorder %s18, 1
    %p146 = por %p144, %p145
    %p148 = scmp.ne.s32.totalorder %s133, %s147
    %p149 = scmp.eq.s32.totalorder %s18, 0
    %p150 = por %p148, %p149
    %s152 = sadd.s32 %s151, 1
    %p155 = scmp.eq.s32.totalorder %s12, 1
    %p156 = scmp.ne.s32.totalorder %s151, %s153
    %p157 = scmp.eq.s32.totalorder %s12, 0
    %p158 = por %p156, %p157
    %p159 = scmp.ne.s32.totalorder %s151, %s153
    %p160 = scmp.eq.s32.totalorder %s17, 1
    %p161 = por %p159, %p160
    %p162 = scmp.ne.s32.totalorder %s153, %s154
    %p163 = scmp.eq.s32.totalorder %s17, 0
    %p164 = por %p162, %p163
    %p165 = scmp.ne.s32.totalorder %s153, %s154
    %p166 = scmp.eq.s32.totalorder %s18, 1
    %p167 = por %p165, %p166
    %p169 = scmp.ne.s32.totalorder %s154, %s168
    %p170 = scmp.eq.s32.totalorder %s18, 0
    %p171 = por %p169, %p170
    %p172 = scmp.le.s32.totalorder 1, %s12
    %p173 = scmp.lt.s32.totalorder %s12, 3
    %p174 = pnand %p172, %p173
    %p175 = pneg %p174
    // Predicated region
    $region9: #{bottleneck_forward.5} parent=5 // pred_check
      _
    $region10: #{bottleneck_forward.5} parent=5 // pred_check_branch
      %177 = sbr.rel (%p174) target = $region12
    $region11: #{bottleneck_forward.5} parent=5 // pred_region
      %s178 = ssub.s32 %s12, 1
      // Predicated region
      $region13: #{bottleneck_forward.5} parent=11 // pred_check
        %p179 = pneg %p73
      $region14: #{bottleneck_forward.5} parent=11 // pred_check_branch
        %181 = sbr.rel (%p179) target = $region16
      $region15: #{bottleneck_forward.5} parent=11 // pred_region
        _
      $region16: #{bottleneck_forward.5} parent=11 // pred_fallthru
        _
      // Predicated region
      $region17: #{bottleneck_forward.5} parent=11 // pred_check
        %p182 = pneg %p94
      $region18: #{bottleneck_forward.5} parent=11 // pred_check_branch
        %184 = sbr.rel (%p182) target = $region20
      $region19: #{bottleneck_forward.5} parent=11 // pred_region
        _
      $region20: #{bottleneck_forward.5} parent=11 // pred_fallthru
        _
    $region12: #{bottleneck_forward.5} parent=5 // pred_fallthru
      _
    %p185 = scmp.lt.s32.totalorder %s12, 2
    // Predicated region
    $region21: #{bottleneck_forward.5} parent=5 // pred_check
      %p186 = pneg %p185
    $region22: #{bottleneck_forward.5} parent=5 // pred_check_branch
      %188 = sbr.rel (%p186) target = $region24
    $region23: #{bottleneck_forward.5} parent=5 // pred_region
      // Predicated region
      $region25: #{bottleneck_forward.5} parent=23 // pred_check
        %p189 = pneg %p46
      $region26: #{bottleneck_forward.5} parent=23 // pred_check_branch
        %191 = sbr.rel (%p189) target = $region28
      $region27: #{bottleneck_forward.5} parent=23 // pred_region
        %s192 = smul.u32 2, %s20
        %p193 = scmp.lt.s32.totalorder %s19, 1
        %s194 = scalar_select %p193, %s19, 1
        %p195 = scmp.lt.s32.totalorder %s192, 1
        %s196 = scalar_select %p195, %s192, 1
        %s197 = smul.addr %s194, 4
        %s198 = sadd.s32 %s196, %s197
        %s199 = smul.addr %s198, 8
        %s200 = scalar_lea.vmem %s0, %s199
        %s201 = smul.u32 2, %s20
      $region28: #{bottleneck_forward.5} parent=23 // pred_fallthru
        _
    $region24: #{bottleneck_forward.5} parent=5 // pred_fallthru
      _
    %p202 = scmp.le.s32.totalorder 1, %s12
    %p203 = scmp.lt.s32.totalorder %s12, 3
    %p204 = pnand %p202, %p203
    %p205 = pneg %p204
    // Predicated region
    $region29: #{bottleneck_forward.5} parent=5 // pred_check
      _
    $region30: #{bottleneck_forward.5} parent=5 // pred_check_branch
      %207 = sbr.rel (%p204) target = $region32
    $region31: #{bottleneck_forward.5} parent=5 // pred_region
      %s208 = ssub.s32 %s12, 1
      %s209 = smul.u32 2, %s22
      %p210 = scmp.lt.s32.totalorder %s21, 1
      %s211 = scalar_select %p210, %s21, 1
      %p212 = scmp.lt.s32.totalorder %s209, 1
      %s213 = scalar_select %p212, %s209, 1
      %s214 = smul.addr %s211, 4
      %s215 = sadd.s32 %s213, %s214
      %s216 = smul.addr %s215, 8
      %s217 = scalar_lea.vmem %s0, %s216
      %p218 = pneg %p52
      %p219 = pneg %p49
      %p220 = pneg %p73
      %p221 = pneg %p70
      %p222 = pneg %p94
      %p223 = pneg %p91
      %p224 = pneg %p122
      %p225 = pneg %p119
      %s226 = smul.u32 2, %s22
      %p227 = scmp.lt.s32.totalorder %s21, 1
      %s228 = scalar_select %p227, %s21, 1
      %p229 = scmp.lt.s32.totalorder %s226, 1
      %s230 = scalar_select %p229, %s226, 1
      %s231 = smul.addr %s228, 2
      %s232 = sadd.s32 %s230, %s231
      %s233 = smul.addr %s232, 4
      %s234 = scalar_lea.vmem %s3, %s233
      %p235 = pneg %p143
      %p236 = pneg %p140
      %p237 = pneg %p164
      %p238 = pneg %p161
      %s239 = smul.u32 2, %s22
      %p240 = scmp.lt.s32.totalorder %s21, 1
      %s241 = scalar_select %p240, %s21, 1
      %p242 = scmp.lt.s32.totalorder %s239, 1
      %s243 = scalar_select %p242, %s239, 1
      %s244 = smul.addr %s241, 4
      %s245 = sadd.s32 %s243, %s244
      %s246 = smul.addr %s245, 8
      %s247 = scalar_lea.vmem %s0, %s246
      %s248 = smul.u32 2, %s22
      %s249 = smul.u32 2, %s22
      %p250 = scmp.lt.s32.totalorder %s21, 1
      %s251 = scalar_select %p250, %s21, 1
      %p252 = scmp.lt.s32.totalorder %s249, 1
      %s253 = scalar_select %p252, %s249, 1
      %s254 = smul.addr %s251, 2
      %s255 = sadd.s32 %s253, %s254
      %s256 = smul.addr %s255, 4
      %s257 = scalar_lea.vmem %s3, %s256
      %s258 = smul.u32 2, %s22
      %p259 = scmp.eq.s32.totalorder %s21, 0
      %p260 = scmp.eq.s32.totalorder %s22, 0
      %p261 = pnand %p259, %p260
      %p262 = pneg %p261
      // Predicated region
      $region33: #{bottleneck_forward.5} parent=31 // pred_check
        _
      $region34: #{bottleneck_forward.5} parent=31 // pred_check_branch
        %264 = sbr.rel (%p261) target = $region36
      $region35: #{bottleneck_forward.5} parent=31 // pred_region
        %vm265 = vcmask 3072
        %266 = vst.msk [vmem:[%s4] sm:$0xf] %vm265, 0.0
        %267 = vst.msk [vmem:[%s5] sm:$0xf] %vm265, 0.0
      $region36: #{bottleneck_forward.5} parent=31 // pred_fallthru
        _
      %v268 = vld [vmem:[%s247] sm:$0xff]
      %v269 = vld [vmem:[%s247 + $0x8] sm:$0xff]
      %v270 = vld [vmem:[%s247 + $0x10] sm:$0xff]
      %v271 = vld [vmem:[%s247 + $0x18] sm:$0xff]
      %v272 = vld [vmem:[%s1] sm:$0xf]
      %v273 = vld [vmem:[%s2] sm:$0xf]
      %275 = vset.pattern.permute.xlu0 0
      %276 = vperm.xlu0 %275, %v273
      %v277 = vpop.permute.xlu0 %276
      %vm279 = vcmask 130048
      %v281 = vsel %vm279, %v272, 0
      %283 = vmatprep.subr.mxu0 %v269
      %284 = vmatpush1.msra.mxu0 %v268
      %285 = vmatprep.subr.mxu0 %v271
      %286 = vmatpush1.msra.mxu0 %v270
      %287 = vmatprep.subr.mxu0 0.0
      %288 = vmatpush1.msra.mxu0 0.0
      %289 = vmatprep.subr.mxu0 0.0
      %290 = vmatpush1.msra.mxu0 0.0
      %291 = vmatprep.subr.mxu0 0.0
      %292 = vmatpush1.msra.mxu0 0.0
      %293 = vmatprep.subr.mxu0 0.0
      %294 = vmatpush1.msra.mxu0 0.0
      %295 = vmatprep.subr.mxu0 0.0
      %296 = vmatpush1.msra.mxu0 0.0
      %297 = vmatprep.subr.mxu0 0.0
      %298 = vmatpush1.msra.mxu0 0.0
      %299 = vmatprep.subr.mxu0 0.0
      %300 = vmatpush1.msra.mxu0 0.0
      %301 = vmatprep.subr.mxu0 0.0
      %302 = vmatpush1.msra.mxu0 0.0
      %303 = vmatprep.subr.mxu0 0.0
      %304 = vmatpush1.msra.mxu0 0.0
      %305 = vmatprep.subr.mxu0 0.0
      %306 = vmatpush1.msra.mxu0 0.0
      %307 = vmatprep.subr.mxu0 0.0
      %308 = vmatpush1.msra.mxu0 0.0
      %309 = vmatprep.subr.mxu0 0.0
      %310 = vmatpush1.msra.mxu0 0.0
      %311 = vmatprep.subr.mxu0 0.0
      %312 = vmatpush1.msra.mxu0 0.0
      %313 = vmatprep.subr.mxu0 0.0
      %314 = vmatpush1.msra.mxu0 0.0
      %315 = vmatprep.subr.mxu0 0.0
      %316 = vmatpush1.msra.mxu0 0.0
      %317 = vmatprep.subr.mxu0 0.0
      %318 = vmatpush1.msra.mxu0 0.0
      %319 = vmatprep.subr.mxu0 0.0
      %320 = vmatpush1.msra.mxu0 0.0
      %321 = vmatprep.subr.mxu0 0.0
      %322 = vmatpush1.msra.mxu0 0.0
      %323 = vmatprep.subr.mxu0 0.0
      %324 = vmatpush1.msra.mxu0 0.0
      %325 = vmatprep.subr.mxu0 0.0
      %326 = vmatpush1.msra.mxu0 0.0
      %327 = vmatprep.subr.mxu0 0.0
      %328 = vmatpush1.msra.mxu0 0.0
      %329 = vmatprep.subr.mxu0 0.0
      %330 = vmatpush1.msra.mxu0 0.0
      %331 = vmatprep.subr.mxu0 0.0
      %332 = vmatpush1.msra.mxu0 0.0
      %333 = vmatprep.subr.mxu0 0.0
      %334 = vmatpush1.msra.mxu0 0.0
      %335 = vmatprep.subr.mxu0 0.0
      %336 = vmatpush1.msra.mxu0 0.0
      %337 = vmatprep.subr.mxu0 0.0
      %338 = vmatpush1.msra.mxu0 0.0
      %339 = vmatprep.subr.mxu0 0.0
      %340 = vmatpush1.msra.mxu0 0.0
      %341 = vmatprep.subr.mxu0 0.0
      %342 = vmatpush1.msra.mxu0 0.0
      %343 = vmatprep.subr.mxu0 0.0
      %344 = vmatpush1.msra.mxu0 0.0
      %345 = vmatprep.subr.mxu0 0.0
      %346 = vmatpush1.msra.mxu0 0.0
      %347 = vmatprep.mubr.f32.mxu0 0.0
      %348 = vmatmul.mubr.f32.gmra.mrb[0].mxu0 %v281
      %v349 = vpop.f32.mrb[0].mxu0
      %v350 = vadd.f32 %v277, %v349
      %v351 = vpop.f32.mrb[0].mxu0
      %v352 = vadd.f32 %v277, %v351
      %353 = vdwg.mxu0
      %v356 = vcombine.low %v350, %v352
      %358 = vst [vmem:[%s257] sm:$0xff] %v356
      %v359 = vld [vmem:[%s4] sm:$0xf]
      %vm360 = vcmask 1043456
      %v361 = vsel %vm360, %v350, 0.0
      %v362 = vsel %vm360, %v352, 0.0
      %v363 = vadd.f32 %v361, %v362
      %364 = vadd.xlane.f32.xlu0 %v363
      %v365 = vpop.xlane.xlu0 %364
      %v366 = vadd.f32 %v359, %v365
      %vm367 = vcmask 3072
      %368 = vst.msk [vmem:[%s4] sm:$0xf] %vm367, %v366
      %v369 = vld [vmem:[%s5] sm:$0xf]
      %v370 = vmul.f32 %v350, %v350
      %v371 = vmul.f32 %v352, %v352
      %v372 = vsel %vm360, %v370, 0.0
      %v373 = vsel %vm360, %v371, 0.0
      %v374 = vadd.f32 %v372, %v373
      %375 = vadd.xlane.f32.xlu0 %v374
      %v376 = vpop.xlane.xlu0 %375
      %v377 = vadd.f32 %v369, %v376
      %378 = vst.msk [vmem:[%s5] sm:$0xf] %vm367, %v377
      %s379 = smul.u32 2, %s22
      %p380 = scmp.lt.s32.totalorder %s21, 1
      %s381 = scalar_select %p380, %s21, 1
      %p382 = scmp.lt.s32.totalorder %s379, 1
      %s383 = scalar_select %p382, %s379, 1
      %s384 = smul.addr %s381, 2
      %s385 = sadd.s32 %s383, %s384
      %s386 = smul.addr %s385, 4
      %s387 = scalar_lea.vmem %s3, %s386
      // Predicated region
      $region37: #{bottleneck_forward.5} parent=31 // pred_check
        %p388 = pneg %p119
      $region38: #{bottleneck_forward.5} parent=31 // pred_check_branch
        %390 = sbr.rel (%p388) target = $region40
      $region39: #{bottleneck_forward.5} parent=31 // pred_region
        %s391 = smul.u32 2, %s22
      $region40: #{bottleneck_forward.5} parent=31 // pred_fallthru
        _
      // Predicated region
      $region41: #{bottleneck_forward.5} parent=31 // pred_check
        %p392 = pneg %p140
      $region42: #{bottleneck_forward.5} parent=31 // pred_check_branch
        %394 = sbr.rel (%p392) target = $region44
      $region43: #{bottleneck_forward.5} parent=31 // pred_region
        _
      $region44: #{bottleneck_forward.5} parent=31 // pred_fallthru
        _
      // Predicated region
      $region45: #{bottleneck_forward.5} parent=31 // pred_check
        %p395 = pneg %p161
      $region46: #{bottleneck_forward.5} parent=31 // pred_check_branch
        %397 = sbr.rel (%p395) target = $region48
      $region47: #{bottleneck_forward.5} parent=31 // pred_region
        _
      $region48: #{bottleneck_forward.5} parent=31 // pred_fallthru
        _
      // Predicated region
      $region49: #{bottleneck_forward.5} parent=31 // pred_check
        %p398 = pneg %p140
      $region50: #{bottleneck_forward.5} parent=31 // pred_check_branch
        %400 = sbr.rel (%p398) target = $region52
      $region51: #{bottleneck_forward.5} parent=31 // pred_region
        _
      $region52: #{bottleneck_forward.5} parent=31 // pred_fallthru
        _
      // Predicated region
      $region53: #{bottleneck_forward.5} parent=31 // pred_check
        %p401 = pneg %p161
      $region54: #{bottleneck_forward.5} parent=31 // pred_check_branch
        %403 = sbr.rel (%p401) target = $region56
      $region55: #{bottleneck_forward.5} parent=31 // pred_region
        _
      $region56: #{bottleneck_forward.5} parent=31 // pred_fallthru
        _
    $region32: #{bottleneck_forward.5} parent=5 // pred_fallthru
      _
    %p404 = scmp.le.s32.totalorder 2, %s12
    // Predicated region
    $region57: #{bottleneck_forward.5} parent=5 // pred_check
      %p405 = pneg %p404
    $region58: #{bottleneck_forward.5} parent=5 // pred_check_branch
      %407 = sbr.rel (%p405) target = $region60
    $region59: #{bottleneck_forward.5} parent=5 // pred_region
      %s408 = ssub.s32 %s12, 2
      // Predicated region
      $region61: #{bottleneck_forward.5} parent=59 // pred_check
        %p409 = pneg %p125
      $region62: #{bottleneck_forward.5} parent=59 // pred_check_branch
        %411 = sbr.rel (%p409) target = $region64
      $region63: #{bottleneck_forward.5} parent=59 // pred_region
        %s412 = smul.u32 2, %s24
        %p413 = scmp.lt.s32.totalorder %s23, 1
        %s414 = scalar_select %p413, %s23, 1
        %p415 = scmp.lt.s32.totalorder %s412, 1
        %s416 = scalar_select %p415, %s412, 1
        %s417 = smul.addr %s414, 2
        %s418 = sadd.s32 %s416, %s417
        %s419 = smul.addr %s418, 4
        %s420 = scalar_lea.vmem %s3, %s419
      $region64: #{bottleneck_forward.5} parent=59 // pred_fallthru
        _
    $region60: #{bottleneck_forward.5} parent=5 // pred_fallthru
      _
  $region6: #{bottleneck_forward.5} parent=0 // loop_footer
    %s16 = sadd.s32 1, %s12
  $region7: #{bottleneck_forward.5} parent=0 // loop_footer_branch
    %11 = sbr.rel target = $region3
  $region8: #{bottleneck_forward.5} parent=0 // loop_exit
    _

// kernel: bottleneck_forward.4
$region0: #{bottleneck_forward.4}
  #allocation0 [shape = 'u32[]', space=smem, size = 0x4, offset = 0x4, fixed_abs, tag = 'smem constant byte address 0x4 - core index']
  #allocation1 [shape = 'u32[144,128]{1,0:T(1,128)}', space=vmem, size = 0x12000, scoped, tag = 'internal scratch']
  %s0 = inlined_call_operand.vmem [shape: f32[2,16,256], index: 0, kind: input, shape index: {}]
  %s1 = inlined_call_operand.vmem [shape: f32[16,1], index: 1, kind: output, shape index: {0}]
  %s2 = inlined_call_operand.vmem [shape: f32[16,1], index: 2, kind: output, shape index: {1}]
  %3 = xla_tuple %s1, %s2
  %s4 = sld [smem:[#allocation0]]
  $region49: #{bottleneck_forward.4} parent=0
    _
  %s6 = ssub.s32 1, %s4
  %s7 = scalar_select 0, %s6, %s4
  loop: start=0, step=1, limit=4
  $region2: #{bottleneck_forward.4} parent=0 // loop_pre_header
    _
  $region3: #{bottleneck_forward.4} parent=0 // loop_header
    %s9 = sphi 0, %s13
    %p10 = scmp.ge.s32.totalorder %s9, 4
    %s16 = sphi 0, %s28
    %s17 = sphi 0, %s24
    %s18 = sphi 0, %s16
    %s19 = sphi 0, %s17
    %s20 = sphi 0, %s18
    %s21 = sphi 0, %s19
    %s33 = sphi 0, %s35
    %s36 = sphi 0, %s33
    %s37 = sphi 0, %s36
    %s53 = sphi 0, %s37
    %s57 = sphi 0, %s57
    %s59 = sphi 0, %s57
    %s60 = sphi 0, %s59
    %s74 = sphi 0, %s60
    %s78 = sphi 0, %s78
    %s80 = sphi 0, %s78
    %s81 = sphi 0, %s80
    %s95 = sphi 0, %s81
  $region4: #{bottleneck_forward.4} parent=0 // loop_header_branch
    %12 = sbr.rel (%p10) target = $region8
  $region5: #{bottleneck_forward.4} parent=0 // loop_body
    %s14 = ssub.s32 %s9, 1
    %s15 = ssub.s32 %s9, 2
    %s22 = sadd.s32 1, %s17
    %p23 = scmp.ge.s32.totalorder %s22, 1
    %s24 = scalar_select %p23, 0, %s22
    %s25 = sadd.s32 1, %s16
    %s26 = scalar_select %p23, %s25, %s16
    %p27 = scmp.ge.s32.totalorder %s26, 2
    %s28 = scalar_select %p27, 0, %s26
    %s29 = ssub.s32 %s16, %s28
    %s30 = ssub.s32 %s17, %s24
    %s31 = sor.u32 %s29, %s30
    %p32 = scmp.eq.s32.totalorder %s31, 0
    %s34 = sadd.s32 %s33, 1
    %s35 = scalar_select %p32, %s33, %s34
    %p38 = pneg %p32
    %p39 = scmp.eq.s32.totalorder %s9, 1
    %p40 = por %p38, %p39
    %p41 = scmp.ne.s32.totalorder %s33, %s36
    %p42 = scmp.eq.s32.totalorder %s9, 0
    %p43 = por %p41, %p42
    %p44 = scmp.ne.s32.totalorder %s33, %s36
    %p45 = scmp.eq.s32.totalorder %s14, 1
    %p46 = por %p44, %p45
    %p47 = scmp.ne.s32.totalorder %s36, %s37
    %p48 = scmp.eq.s32.totalorder %s14, 0
    %p49 = por %p47, %p48
    %p50 = scmp.ne.s32.totalorder %s36, %s37
    %p51 = scmp.eq.s32.totalorder %s15, 1
    %p52 = por %p50, %p51
    %p54 = scmp.ne.s32.totalorder %s37, %s53
    %p55 = scmp.eq.s32.totalorder %s15, 0
    %p56 = por %p54, %p55
    %s58 = sadd.s32 %s57, 1
    %p61 = scmp.eq.s32.totalorder %s9, 1
    %p62 = scmp.ne.s32.totalorder %s57, %s59
    %p63 = scmp.eq.s32.totalorder %s9, 0
    %p64 = por %p62, %p63
    %p65 = scmp.ne.s32.totalorder %s57, %s59
    %p66 = scmp.eq.s32.totalorder %s14, 1
    %p67 = por %p65, %p66
    %p68 = scmp.ne.s32.totalorder %s59, %s60
    %p69 = scmp.eq.s32.totalorder %s14, 0
    %p70 = por %p68, %p69
    %p71 = scmp.ne.s32.totalorder %s59, %s60
    %p72 = scmp.eq.s32.totalorder %s15, 1
    %p73 = por %p71, %p72
    %p75 = scmp.ne.s32.totalorder %s60, %s74
    %p76 = scmp.eq.s32.totalorder %s15, 0
    %p77 = por %p75, %p76
    %s79 = sadd.s32 %s78, 1
    %p82 = scmp.eq.s32.totalorder %s9, 1
    %p83 = scmp.ne.s32.totalorder %s78, %s80
    %p84 = scmp.eq.s32.totalorder %s9, 0
    %p85 = por %p83, %p84
    %p86 = scmp.ne.s32.totalorder %s78, %s80
    %p87 = scmp.eq.s32.totalorder %s14, 1
    %p88 = por %p86, %p87
    %p89 = scmp.ne.s32.totalorder %s80, %s81
    %p90 = scmp.eq.s32.totalorder %s14, 0
    %p91 = por %p89, %p90
    %p92 = scmp.ne.s32.totalorder %s80, %s81
    %p93 = scmp.eq.s32.totalorder %s15, 1
    %p94 = por %p92, %p93
    %p96 = scmp.ne.s32.totalorder %s81, %s95
    %p97 = scmp.eq.s32.totalorder %s15, 0
    %p98 = por %p96, %p97
    %p99 = scmp.le.s32.totalorder 1, %s9
    %p100 = scmp.lt.s32.totalorder %s9, 3
    %p101 = pnand %p99, %p100
    %p102 = pneg %p101
    // Predicated region
    $region9: #{bottleneck_forward.4} parent=5 // pred_check
      _
    $region10: #{bottleneck_forward.4} parent=5 // pred_check_branch
      %104 = sbr.rel (%p101) target = $region12
    $region11: #{bottleneck_forward.4} parent=5 // pred_region
      %s105 = ssub.s32 %s9, 1
    $region12: #{bottleneck_forward.4} parent=5 // pred_fallthru
      _
    %p106 = scmp.lt.s32.totalorder %s9, 2
    // Predicated region
    $region13: #{bottleneck_forward.4} parent=5 // pred_check
      %p107 = pneg %p106
    $region14: #{bottleneck_forward.4} parent=5 // pred_check_branch
      %109 = sbr.rel (%p107) target = $region16
    $region15: #{bottleneck_forward.4} parent=5 // pred_region
      // Predicated region
      $region17: #{bottleneck_forward.4} parent=15 // pred_check
        %p110 = pneg %p43
      $region18: #{bottleneck_forward.4} parent=15 // pred_check_branch
        %112 = sbr.rel (%p110) target = $region20
      $region19: #{bottleneck_forward.4} parent=15 // pred_region
        %s113 = smul.u32 2, %s17
        %p114 = scmp.lt.s32.totalorder %s16, 1
        %s115 = scalar_select %p114, %s16, 1
        %p116 = scmp.lt.s32.totalorder %s113, 1
        %s117 = scalar_select %p116, %s113, 1
        %s118 = smul.addr %s115, 4
        %s119 = sadd.s32 %s117, %s118
        %s120 = smul.addr %s119, 8
        %s121 = scalar_lea.vmem %s0, %s120
        %s122 = smul.u32 2, %s17
      $region20: #{bottleneck_forward.4} parent=15 // pred_fallthru
        _
    $region16: #{bottleneck_forward.4} parent=5 // pred_fallthru
      _
    %p123 = scmp.le.s32.totalorder 1, %s9
    %p124 = scmp.lt.s32.totalorder %s9, 3
    %p125 = pnand %p123, %p124
    %p126 = pneg %p125
    // Predicated region
    $region21: #{bottleneck_forward.4} parent=5 // pred_check
      _
    $region22: #{bottleneck_forward.4} parent=5 // pred_check_branch
      %128 = sbr.rel (%p125) target = $region24
    $region23: #{bottleneck_forward.4} parent=5 // pred_region
      %s129 = ssub.s32 %s9, 1
      %s130 = smul.u32 2, %s19
      %p131 = scmp.lt.s32.totalorder %s18, 1
      %s132 = scalar_select %p131, %s18, 1
      %p133 = scmp.lt.s32.totalorder %s130, 1
      %s134 = scalar_select %p133, %s130, 1
      %s135 = smul.addr %s132, 4
      %s136 = sadd.s32 %s134, %s135
      %s137 = smul.addr %s136, 8
      %s138 = scalar_lea.vmem %s0, %s137
      %p139 = pneg %p49
      %p140 = pneg %p46
      %p141 = pneg %p70
      %p142 = pneg %p67
      %p143 = pneg %p91
      %p144 = pneg %p88
      %s145 = smul.u32 2, %s19
      %p146 = scmp.lt.s32.totalorder %s18, 1
      %s147 = scalar_select %p146, %s18, 1
      %p148 = scmp.lt.s32.totalorder %s145, 1
      %s149 = scalar_select %p148, %s145, 1
      %s150 = smul.addr %s147, 4
      %s151 = sadd.s32 %s149, %s150
      %s152 = smul.addr %s151, 8
      %s153 = scalar_lea.vmem %s0, %s152
      %s154 = smul.u32 2, %s19
      %p155 = scmp.eq.s32.totalorder %s18, 0
      %p156 = scmp.eq.s32.totalorder %s19, 0
      %p157 = pnand %p155, %p156
      %p158 = pneg %p157
      // Predicated region
      $region25: #{bottleneck_forward.4} parent=23 // pred_check
        _
      $region26: #{bottleneck_forward.4} parent=23 // pred_check_branch
        %160 = sbr.rel (%p157) target = $region28
      $region27: #{bottleneck_forward.4} parent=23 // pred_region
        %vm161 = vcmask 7168
        %162 = vst.msk [vmem:[%s1] sm:$0xff] %vm161, 0.0
        %163 = vst.msk [vmem:[%s1 + $0x8] sm:$0xff] %vm161, 0.0
        %164 = vst.msk [vmem:[%s2] sm:$0xff] %vm161, 0.0
        %165 = vst.msk [vmem:[%s2 + $0x8] sm:$0xff] %vm161, 0.0
      $region28: #{bottleneck_forward.4} parent=23 // pred_fallthru
        _
      %v166 = vld [vmem:[%s153] sm:$0xff]
      %v167 = vld [vmem:[%s153 + $0x8] sm:$0xff]
      %v168 = vld [vmem:[%s153 + $0x10] sm:$0xff]
      %v169 = vld [vmem:[%s153 + $0x18] sm:$0xff]
      %v170 = vld [vmem:[%s1] sm:$0xff]
      %v171 = vld [vmem:[%s1 + $0x8] sm:$0xff]
      %v172 = vadd.f32 %v166, %v167
      %173 = vadd.xlane.f32.xlu0 %v172
      %v174 = vpop.xlane.xlu0 %173
      %v175 = vadd.f32 %v168, %v169
      %176 = vadd.xlane.f32.xlu0 %v175
      %v177 = vpop.xlane.xlu0 %176
      %v178 = vadd.f32 %v170, %v174
      %v179 = vadd.f32 %v171, %v177
      %vm180 = vcmask 7168
      %181 = vst.msk [vmem:[%s1] sm:$0xff] %vm180, %v178
      %182 = vst.msk [vmem:[%s1 + $0x8] sm:$0xff] %vm180, %v179
      %v183 = vld [vmem:[%s2] sm:$0xff]
      %v184 = vld [vmem:[%s2 + $0x8] sm:$0xff]
      %v185 = vmul.f32 %v166, %v166
      %v186 = vmul.f32 %v167, %v167
      %v187 = vmul.f32 %v168, %v168
      %v188 = vmul.f32 %v169, %v169
      %v189 = vadd.f32 %v185, %v186
      %190 = vadd.xlane.f32.xlu0 %v189
      %v191 = vpop.xlane.xlu0 %190
      %v192 = vadd.f32 %v187, %v188
      %193 = vadd.xlane.f32.xlu0 %v192
      %v194 = vpop.xlane.xlu0 %193
      %v195 = vadd.f32 %v183, %v191
      %v196 = vadd.f32 %v184, %v194
      %197 = vst.msk [vmem:[%s2] sm:$0xff] %vm180, %v195
      %198 = vst.msk [vmem:[%s2 + $0x8] sm:$0xff] %vm180, %v196
      // Predicated region
      $region29: #{bottleneck_forward.4} parent=23 // pred_check
        %p199 = pneg %p67
      $region30: #{bottleneck_forward.4} parent=23 // pred_check_branch
        %201 = sbr.rel (%p199) target = $region32
      $region31: #{bottleneck_forward.4} parent=23 // pred_region
        _
      $region32: #{bottleneck_forward.4} parent=23 // pred_fallthru
        _
      // Predicated region
      $region33: #{bottleneck_forward.4} parent=23 // pred_check
        %p202 = pneg %p88
      $region34: #{bottleneck_forward.4} parent=23 // pred_check_branch
        %204 = sbr.rel (%p202) target = $region36
      $region35: #{bottleneck_forward.4} parent=23 // pred_region
        _
      $region36: #{bottleneck_forward.4} parent=23 // pred_fallthru
        _
      // Predicated region
      $region37: #{bottleneck_forward.4} parent=23 // pred_check
        %p205 = pneg %p67
      $region38: #{bottleneck_forward.4} parent=23 // pred_check_branch
        %207 = sbr.rel (%p205) target = $region40
      $region39: #{bottleneck_forward.4} parent=23 // pred_region
        _
      $region40: #{bottleneck_forward.4} parent=23 // pred_fallthru
        _
      // Predicated region
      $region41: #{bottleneck_forward.4} parent=23 // pred_check
        %p208 = pneg %p88
      $region42: #{bottleneck_forward.4} parent=23 // pred_check_branch
        %210 = sbr.rel (%p208) target = $region44
      $region43: #{bottleneck_forward.4} parent=23 // pred_region
        _
      $region44: #{bottleneck_forward.4} parent=23 // pred_fallthru
        _
    $region24: #{bottleneck_forward.4} parent=5 // pred_fallthru
      _
    %p211 = scmp.le.s32.totalorder 2, %s9
    // Predicated region
    $region45: #{bottleneck_forward.4} parent=5 // pred_check
      %p212 = pneg %p211
    $region46: #{bottleneck_forward.4} parent=5 // pred_check_branch
      %214 = sbr.rel (%p212) target = $region48
    $region47: #{bottleneck_forward.4} parent=5 // pred_region
      %s215 = ssub.s32 %s9, 2
    $region48: #{bottleneck_forward.4} parent=5 // pred_fallthru
      _
  $region6: #{bottleneck_forward.4} parent=0 // loop_footer
    %s13 = sadd.s32 1, %s9
  $region7: #{bottleneck_forward.4} parent=0 // loop_footer_branch
    %8 = sbr.rel target = $region3
  $region8: #{bottleneck_forward.4} parent=0 // loop_exit
    _

// kernel: bottleneck_forward.7
$region0: #{bottleneck_forward.7}
  #allocation0 [shape = 'u32[]', space=smem, size = 0x4, offset = 0x4, fixed_abs, tag = 'smem constant byte address 0x4 - core index']
  #allocation1 [shape = 'u32[144,128]{1,0:T(1,128)}', space=vmem, size = 0x12000, scoped, tag = 'internal scratch']
  %s0 = inlined_call_operand.vmem [shape: f32[2,4,256], index: 0, kind: input, shape index: {}]
  %s1 = inlined_call_operand.vmem [shape: f32[2,16,256], index: 1, kind: input, shape index: {}]
  %s2 = inlined_call_operand.vmem [shape: f32[16,4], index: 2, kind: input, shape index: {}]
  %s3 = inlined_call_operand.vmem [shape: f32[16,1], index: 3, kind: input, shape index: {}]
  %s4 = inlined_call_operand.vmem [shape: f32[2,16,256], index: 4, kind: output, shape index: {}]
  %s5 = sld [smem:[#allocation0]]
  $region49: #{bottleneck_forward.7} parent=0
    _
  %s7 = ssub.s32 1, %s5
  %s8 = scalar_select 0, %s7, %s5
  loop: start=0, step=1, limit=4
  $region2: #{bottleneck_forward.7} parent=0 // loop_pre_header
    _
  $region3: #{bottleneck_forward.7} parent=0 // loop_header
    %s10 = sphi 0, %s14
    %p11 = scmp.ge.s32.totalorder %s10, 4
    %s17 = sphi 0, %s29
    %s18 = sphi 0, %s25
    %s19 = sphi 0, %s17
    %s20 = sphi 0, %s18
    %s21 = sphi 0, %s19
    %s22 = sphi 0, %s20
    %s34 = sphi 0, %s36
    %s37 = sphi 0, %s34
    %s38 = sphi 0, %s37
    %s54 = sphi 0, %s38
    %s62 = sphi 0, %s64
    %s65 = sphi 0, %s62
    %s66 = sphi 0, %s65
    %s82 = sphi 0, %s66
    %s86 = sphi 0, %s86
    %s88 = sphi 0, %s86
    %s89 = sphi 0, %s88
    %s103 = sphi 0, %s89
    %s107 = sphi 0, %s107
    %s109 = sphi 0, %s107
    %s110 = sphi 0, %s109
    %s124 = sphi 0, %s110
    %s132 = sphi 0, %s134
    %s135 = sphi 0, %s132
    %s136 = sphi 0, %s135
    %s152 = sphi 0, %s136
  $region4: #{bottleneck_forward.7} parent=0 // loop_header_branch
    %13 = sbr.rel (%p11) target = $region8
  $region5: #{bottleneck_forward.7} parent=0 // loop_body
    %s15 = ssub.s32 %s10, 1
    %s16 = ssub.s32 %s10, 2
    %s23 = sadd.s32 1, %s18
    %p24 = scmp.ge.s32.totalorder %s23, 1
    %s25 = scalar_select %p24, 0, %s23
    %s26 = sadd.s32 1, %s17
    %s27 = scalar_select %p24, %s26, %s17
    %p28 = scmp.ge.s32.totalorder %s27, 2
    %s29 = scalar_select %p28, 0, %s27
    %s30 = ssub.s32 %s17, %s29
    %s31 = ssub.s32 %s18, %s25
    %s32 = sor.u32 %s30, %s31
    %p33 = scmp.eq.s32.totalorder %s32, 0
    %s35 = sadd.s32 %s34, 1
    %s36 = scalar_select %p33, %s34, %s35
    %p39 = pneg %p33
    %p40 = scmp.eq.s32.totalorder %s10, 1
    %p41 = por %p39, %p40
    %p42 = scmp.ne.s32.totalorder %s34, %s37
    %p43 = scmp.eq.s32.totalorder %s10, 0
    %p44 = por %p42, %p43
    %p45 = scmp.ne.s32.totalorder %s34, %s37
    %p46 = scmp.eq.s32.totalorder %s15, 1
    %p47 = por %p45, %p46
    %p48 = scmp.ne.s32.totalorder %s37, %s38
    %p49 = scmp.eq.s32.totalorder %s15, 0
    %p50 = por %p48, %p49
    %p51 = scmp.ne.s32.totalorder %s37, %s38
    %p52 = scmp.eq.s32.totalorder %s16, 1
    %p53 = por %p51, %p52
    %p55 = scmp.ne.s32.totalorder %s38, %s54
    %p56 = scmp.eq.s32.totalorder %s16, 0
    %p57 = por %p55, %p56
    %s58 = ssub.s32 %s17, %s29
    %s59 = ssub.s32 %s18, %s25
    %s60 = sor.u32 %s58, %s59
    %p61 = scmp.eq.s32.totalorder %s60, 0
    %s63 = sadd.s32 %s62, 1
    %s64 = scalar_select %p61, %s62, %s63
    %p67 = pneg %p61
    %p68 = scmp.eq.s32.totalorder %s10, 1
    %p69 = por %p67, %p68
    %p70 = scmp.ne.s32.totalorder %s62, %s65
    %p71 = scmp.eq.s32.totalorder %s10, 0
    %p72 = por %p70, %p71
    %p73 = scmp.ne.s32.totalorder %s62, %s65
    %p74 = scmp.eq.s32.totalorder %s15, 1
    %p75 = por %p73, %p74
    %p76 = scmp.ne.s32.totalorder %s65, %s66
    %p77 = scmp.eq.s32.totalorder %s15, 0
    %p78 = por %p76, %p77
    %p79 = scmp.ne.s32.totalorder %s65, %s66
    %p80 = scmp.eq.s32.totalorder %s16, 1
    %p81 = por %p79, %p80
    %p83 = scmp.ne.s32.totalorder %s66, %s82
    %p84 = scmp.eq.s32.totalorder %s16, 0
    %p85 = por %p83, %p84
    %s87 = sadd.s32 %s86, 1
    %p90 = scmp.eq.s32.totalorder %s10, 1
    %p91 = scmp.ne.s32.totalorder %s86, %s88
    %p92 = scmp.eq.s32.totalorder %s10, 0
    %p93 = por %p91, %p92
    %p94 = scmp.ne.s32.totalorder %s86, %s88
    %p95 = scmp.eq.s32.totalorder %s15, 1
    %p96 = por %p94, %p95
    %p97 = scmp.ne.s32.totalorder %s88, %s89
    %p98 = scmp.eq.s32.totalorder %s15, 0
    %p99 = por %p97, %p98
    %p100 = scmp.ne.s32.totalorder %s88, %s89
    %p101 = scmp.eq.s32.totalorder %s16, 1
    %p102 = por %p100, %p101
    %p104 = scmp.ne.s32.totalorder %s89, %s103
    %p105 = scmp.eq.s32.totalorder %s16, 0
    %p106 = por %p104, %p105
    %s108 = sadd.s32 %s107, 1
    %p111 = scmp.eq.s32.totalorder %s10, 1
    %p112 = scmp.ne.s32.totalorder %s107, %s109
    %p113 = scmp.eq.s32.totalorder %s10, 0
    %p114 = por %p112, %p113
    %p115 = scmp.ne.s32.totalorder %s107, %s109
    %p116 = scmp.eq.s32.totalorder %s15, 1
    %p117 = por %p115, %p116
    %p118 = scmp.ne.s32.totalorder %s109, %s110
    %p119 = scmp.eq.s32.totalorder %s15, 0
    %p120 = por %p118, %p119
    %p121 = scmp.ne.s32.totalorder %s109, %s110
    %p122 = scmp.eq.s32.totalorder %s16, 1
    %p123 = por %p121, %p122
    %p125 = scmp.ne.s32.totalorder %s110, %s124
    %p126 = scmp.eq.s32.totalorder %s16, 0
    %p127 = por %p125, %p126
    %s128 = ssub.s32 %s17, %s29
    %s129 = ssub.s32 %s18, %s25
    %s130 = sor.u32 %s128, %s129
    %p131 = scmp.eq.s32.totalorder %s130, 0
    %s133 = sadd.s32 %s132, 1
    %s134 = scalar_select %p131, %s132, %s133
    %p137 = pneg %p131
    %p138 = scmp.eq.s32.totalorder %s10, 1
    %p139 = por %p137, %p138
    %p140 = scmp.ne.s32.totalorder %s132, %s135
    %p141 = scmp.eq.s32.totalorder %s10, 0
    %p142 = por %p140, %p141
    %p143 = scmp.ne.s32.totalorder %s132, %s135
    %p144 = scmp.eq.s32.totalorder %s15, 1
    %p145 = por %p143, %p144
    %p146 = scmp.ne.s32.totalorder %s135, %s136
    %p147 = scmp.eq.s32.totalorder %s15, 0
    %p148 = por %p146, %p147
    %p149 = scmp.ne.s32.totalorder %s135, %s136
    %p150 = scmp.eq.s32.totalorder %s16, 1
    %p151 = por %p149, %p150
    %p153 = scmp.ne.s32.totalorder %s136, %s152
    %p154 = scmp.eq.s32.totalorder %s16, 0
    %p155 = por %p153, %p154
    %p156 = scmp.le.s32.totalorder 1, %s10
    %p157 = scmp.lt.s32.totalorder %s10, 3
    %p158 = pnand %p156, %p157
    %p159 = pneg %p158
    // Predicated region
    $region9: #{bottleneck_forward.7} parent=5 // pred_check
      _
    $region10: #{bottleneck_forward.7} parent=5 // pred_check_branch
      %161 = sbr.rel (%p158) target = $region12
    $region11: #{bottleneck_forward.7} parent=5 // pred_region
      %s162 = ssub.s32 %s10, 1
      // Predicated region
      $region13: #{bottleneck_forward.7} parent=11 // pred_check
        %p163 = pneg %p99
      $region14: #{bottleneck_forward.7} parent=11 // pred_check_branch
        %165 = sbr.rel (%p163) target = $region16
      $region15: #{bottleneck_forward.7} parent=11 // pred_region
        _
      $region16: #{bottleneck_forward.7} parent=11 // pred_fallthru
        _
      // Predicated region
      $region17: #{bottleneck_forward.7} parent=11 // pred_check
        %p166 = pneg %p120
      $region18: #{bottleneck_forward.7} parent=11 // pred_check_branch
        %168 = sbr.rel (%p166) target = $region20
      $region19: #{bottleneck_forward.7} parent=11 // pred_region
        _
      $region20: #{bottleneck_forward.7} parent=11 // pred_fallthru
        _
    $region12: #{bottleneck_forward.7} parent=5 // pred_fallthru
      _
    %p169 = scmp.lt.s32.totalorder %s10, 2
    // Predicated region
    $region21: #{bottleneck_forward.7} parent=5 // pred_check
      %p170 = pneg %p169
    $region22: #{bottleneck_forward.7} parent=5 // pred_check_branch
      %172 = sbr.rel (%p170) target = $region24
    $region23: #{bottleneck_forward.7} parent=5 // pred_region
      // Predicated region
      $region25: #{bottleneck_forward.7} parent=23 // pred_check
        %p173 = pneg %p44
      $region26: #{bottleneck_forward.7} parent=23 // pred_check_branch
        %175 = sbr.rel (%p173) target = $region28
      $region27: #{bottleneck_forward.7} parent=23 // pred_region
        %s176 = smul.u32 2, %s18
        %p177 = scmp.lt.s32.totalorder %s17, 1
        %s178 = scalar_select %p177, %s17, 1
        %p179 = scmp.lt.s32.totalorder %s176, 1
        %s180 = scalar_select %p179, %s176, 1
        %s181 = smul.addr %s178, 2
        %s182 = sadd.s32 %s180, %s181
        %s183 = smul.addr %s182, 4
        %s184 = scalar_lea.vmem %s0, %s183
        %s185 = smul.u32 2, %s18
      $region28: #{bottleneck_forward.7} parent=23 // pred_fallthru
        _
      // Predicated region
      $region29: #{bottleneck_forward.7} parent=23 // pred_check
        %p186 = pneg %p72
      $region30: #{bottleneck_forward.7} parent=23 // pred_check_branch
        %188 = sbr.rel (%p186) target = $region32
      $region31: #{bottleneck_forward.7} parent=23 // pred_region
        %s189 = smul.u32 2, %s18
        %p190 = scmp.lt.s32.totalorder %s17, 1
        %s191 = scalar_select %p190, %s17, 1
        %p192 = scmp.lt.s32.totalorder %s189, 1
        %s193 = scalar_select %p192, %s189, 1
        %s194 = smul.addr %s191, 4
        %s195 = sadd.s32 %s193, %s194
        %s196 = smul.addr %s195, 8
        %s197 = scalar_lea.vmem %s1, %s196
        %s198 = smul.u32 2, %s18
      $region32: #{bottleneck_forward.7} parent=23 // pred_fallthru
        _
    $region24: #{bottleneck_forward.7} parent=5 // pred_fallthru
      _
    %p199 = scmp.le.s32.totalorder 1, %s10
    %p200 = scmp.lt.s32.totalorder %s10, 3
    %p201 = pnand %p199, %p200
    %p202 = pneg %p201
    // Predicated region
    $region33: #{bottleneck_forward.7} parent=5 // pred_check
      _
    $region34: #{bottleneck_forward.7} parent=5 // pred_check_branch
      %204 = sbr.rel (%p201) target = $region36
    $region35: #{bottleneck_forward.7} parent=5 // pred_region
      %s205 = ssub.s32 %s10, 1
      %s206 = smul.u32 2, %s20
      %p207 = scmp.lt.s32.totalorder %s19, 1
      %s208 = scalar_select %p207, %s19, 1
      %p209 = scmp.lt.s32.totalorder %s206, 1
      %s210 = scalar_select %p209, %s206, 1
      %s211 = smul.addr %s208, 2
      %s212 = sadd.s32 %s210, %s211
      %s213 = smul.addr %s212, 4
      %s214 = scalar_lea.vmem %s0, %s213
      %p215 = pneg %p50
      %p216 = pneg %p47
      %s217 = smul.u32 2, %s20
      %p218 = scmp.lt.s32.totalorder %s19, 1
      %s219 = scalar_select %p218, %s19, 1
      %p220 = scmp.lt.s32.totalorder %s217, 1
      %s221 = scalar_select %p220, %s217, 1
      %s222 = smul.addr %s219, 4
      %s223 = sadd.s32 %s221, %s222
      %s224 = smul.addr %s223, 8
      %s225 = scalar_lea.vmem %s1, %s224
      %p226 = pneg %p78
      %p227 = pneg %p75
      %p228 = pneg %p99
      %p229 = pneg %p96
      %p230 = pneg %p120
      %p231 = pneg %p117
      %p232 = pneg %p148
      %p233 = pneg %p145
      %s234 = smul.u32 2, %s20
      %p235 = scmp.lt.s32.totalorder %s19, 1
      %s236 = scalar_select %p235, %s19, 1
      %p237 = scmp.lt.s32.totalorder %s234, 1
      %s238 = scalar_select %p237, %s234, 1
      %s239 = smul.addr %s236, 4
      %s240 = sadd.s32 %s238, %s239
      %s241 = smul.addr %s240, 8
      %s242 = scalar_lea.vmem %s4, %s241
      %s243 = smul.u32 2, %s20
      %p244 = scmp.lt.s32.totalorder %s19, 1
      %s245 = scalar_select %p244, %s19, 1
      %p246 = scmp.lt.s32.totalorder %s243, 1
      %s247 = scalar_select %p246, %s243, 1
      %s248 = smul.addr %s245, 2
      %s249 = sadd.s32 %s247, %s248
      %s250 = smul.addr %s249, 4
      %s251 = scalar_lea.vmem %s0, %s250
      %s252 = smul.u32 2, %s20
      %s253 = smul.u32 2, %s20
      %p254 = scmp.lt.s32.totalorder %s19, 1
      %s255 = scalar_select %p254, %s19, 1
      %p256 = scmp.lt.s32.totalorder %s253, 1
      %s257 = scalar_select %p256, %s253, 1
      %s258 = smul.addr %s255, 4
      %s259 = sadd.s32 %s257, %s258
      %s260 = smul.addr %s259, 8
      %s261 = scalar_lea.vmem %s1, %s260
      %s262 = smul.u32 2, %s20
      %s263 = smul.u32 2, %s20
      %p264 = scmp.lt.s32.totalorder %s19, 1
      %s265 = scalar_select %p264, %s19, 1
      %p266 = scmp.lt.s32.totalorder %s263, 1
      %s267 = scalar_select %p266, %s263, 1
      %s268 = smul.addr %s265, 4
      %s269 = sadd.s32 %s267, %s268
      %s270 = smul.addr %s269, 8
      %s271 = scalar_lea.vmem %s4, %s270
      %s272 = smul.u32 2, %s20
      %v273 = vld [vmem:[%s251] sm:$0xff]
      %v274 = vld [vmem:[%s261] sm:$0xff]
      %v275 = vld [vmem:[%s261 + $0x8] sm:$0xff]
      %v276 = vld [vmem:[%s261 + $0x10] sm:$0xff]
      %v277 = vld [vmem:[%s261 + $0x18] sm:$0xff]
      %v278 = vld [vmem:[%s2] sm:$0xff]
      %v279 = vld [vmem:[%s2 + $0x8] sm:$0xff]
      %v280 = vld [vmem:[%s3] sm:$0xff]
      %v281 = vld [vmem:[%s3 + $0x8] sm:$0xff]
      %283 = vset.pattern.permute.xlu0 0
      %284 = vperm.xlu0 %283, %v280
      %v285 = vpop.permute.xlu0 %284
      %288 = vset.pattern.permute.xlu0 0
      %289 = vperm.xlu0 %288, %v281
      %v290 = vpop.permute.xlu0 %289
      %v293 = vcombine.high %v273, %v273
      %vm294 = vcmask 31744
      %v296 = vsel %vm294, %v278, 0
      %v299 = vsel %vm294, %v279, 0
      %vm301 = vcmask 1043456
      %v302 = vsel %vm301, %v273, 0
      %v304 = vsel %vm301, %v293, 0
      %306 = vmatprep.subr.mxu0 %v304
      %307 = vmatpush1.msra.mxu0 %v302
      %308 = vmatprep.subr.mxu0 0.0
      %309 = vmatpush1.msra.mxu0 0.0
      %310 = vmatprep.subr.mxu0 0.0
      %311 = vmatpush1.msra.mxu0 0.0
      %312 = vmatprep.subr.mxu0 0.0
      %313 = vmatpush1.msra.mxu0 0.0
      %314 = vmatprep.subr.mxu0 0.0
      %315 = vmatpush1.msra.mxu0 0.0
      %316 = vmatprep.subr.mxu0 0.0
      %317 = vmatpush1.msra.mxu0 0.0
      %318 = vmatprep.subr.mxu0 0.0
      %319 = vmatpush1.msra.mxu0 0.0
      %320 = vmatprep.subr.mxu0 0.0
      %321 = vmatpush1.msra.mxu0 0.0
      %322 = vmatprep.subr.mxu0 0.0
      %323 = vmatpush1.msra.mxu0 0.0
      %324 = vmatprep.subr.mxu0 0.0
      %325 = vmatpush1.msra.mxu0 0.0
      %326 = vmatprep.subr.mxu0 0.0
      %327 = vmatpush1.msra.mxu0 0.0
      %328 = vmatprep.subr.mxu0 0.0
      %329 = vmatpush1.msra.mxu0 0.0
      %330 = vmatprep.subr.mxu0 0.0
      %331 = vmatpush1.msra.mxu0 0.0
      %332 = vmatprep.subr.mxu0 0.0
      %333 = vmatpush1.msra.mxu0 0.0
      %334 = vmatprep.subr.mxu0 0.0
      %335 = vmatpush1.msra.mxu0 0.0
      %336 = vmatprep.subr.mxu0 0.0
      %337 = vmatpush1.msra.mxu0 0.0
      %338 = vmatprep.subr.mxu0 0.0
      %339 = vmatpush1.msra.mxu0 0.0
      %340 = vmatprep.subr.mxu0 0.0
      %341 = vmatpush1.msra.mxu0 0.0
      %342 = vmatprep.subr.mxu0 0.0
      %343 = vmatpush1.msra.mxu0 0.0
      %344 = vmatprep.subr.mxu0 0.0
      %345 = vmatpush1.msra.mxu0 0.0
      %346 = vmatprep.subr.mxu0 0.0
      %347 = vmatpush1.msra.mxu0 0.0
      %348 = vmatprep.subr.mxu0 0.0
      %349 = vmatpush1.msra.mxu0 0.0
      %350 = vmatprep.subr.mxu0 0.0
      %351 = vmatpush1.msra.mxu0 0.0
      %352 = vmatprep.subr.mxu0 0.0
      %353 = vmatpush1.msra.mxu0 0.0
      %354 = vmatprep.subr.mxu0 0.0
      %355 = vmatpush1.msra.mxu0 0.0
      %356 = vmatprep.subr.mxu0 0.0
      %357 = vmatpush1.msra.mxu0 0.0
      %358 = vmatprep.subr.mxu0 0.0
      %359 = vmatpush1.msra.mxu0 0.0
      %360 = vmatprep.subr.mxu0 0.0
      %361 = vmatpush1.msra.mxu0 0.0
      %362 = vmatprep.subr.mxu0 0.0
      %363 = vmatpush1.msra.mxu0 0.0
      %364 = vmatprep.subr.mxu0 0.0
      %365 = vmatpush1.msra.mxu0 0.0
      %366 = vmatprep.subr.mxu0 0.0
      %367 = vmatpush1.msra.mxu0 0.0
      %368 = vmatprep.subr.mxu0 0.0
      %369 = vmatpush1.msra.mxu0 0.0
      %370 = vmatprep.mubr.f32.mxu0 0.0
      %371 = vmatmul.mubr.f32.gmra.mrb[0].mxu0 %v296
      %v372 = vpop.f32.mrb[0].mxu0
      %v373 = vadd.f32 %v285, %v372
      %v374 = vpop.f32.mrb[0].mxu0
      %v375 = vadd.f32 %v285, %v374
      %376 = vmatprep.mubr.f32.mxu0 0.0
      %377 = vmatmul.mubr.f32.gmra.mrb[0].mxu0 %v299
      %v378 = vpop.f32.mrb[0].mxu0
      %v379 = vadd.f32 %v290, %v378
      %v380 = vpop.f32.mrb[0].mxu0
      %v381 = vadd.f32 %v290, %v380
      %382 = vdwg.mxu0
      %v383 = vadd.f32 %v373, %v274
      %v384 = vadd.f32 %v375, %v275
      %v385 = vadd.f32 %v379, %v276
      %v386 = vadd.f32 %v381, %v277
      %387 = vst [vmem:[%s271] sm:$0xff] %v383
      %388 = vst [vmem:[%s271 + $0x8] sm:$0xff] %v384
      %389 = vst [vmem:[%s271 + $0x10] sm:$0xff] %v385
      %390 = vst [vmem:[%s271 + $0x18] sm:$0xff] %v386
      %s391 = smul.u32 2, %s20
      %p392 = scmp.lt.s32.totalorder %s19, 1
      %s393 = scalar_select %p392, %s19, 1
      %p394 = scmp.lt.s32.totalorder %s391, 1
      %s395 = scalar_select %p394, %s391, 1
      %s396 = smul.addr %s393, 4
      %s397 = sadd.s32 %s395, %s396
      %s398 = smul.addr %s397, 8
      %s399 = scalar_lea.vmem %s4, %s398
      // Predicated region
      $region37: #{bottleneck_forward.7} parent=35 // pred_check
        %p400 = pneg %p145
      $region38: #{bottleneck_forward.7} parent=35 // pred_check_branch
        %402 = sbr.rel (%p400) target = $region40
      $region39: #{bottleneck_forward.7} parent=35 // pred_region
        %s403 = smul.u32 2, %s20
      $region40: #{bottleneck_forward.7} parent=35 // pred_fallthru
        _
    $region36: #{bottleneck_forward.7} parent=5 // pred_fallthru
      _
    %p404 = scmp.le.s32.totalorder 2, %s10
    // Predicated region
    $region41: #{bottleneck_forward.7} parent=5 // pred_check
      %p405 = pneg %p404
    $region42: #{bottleneck_forward.7} parent=5 // pred_check_branch
      %407 = sbr.rel (%p405) target = $region44
    $region43: #{bottleneck_forward.7} parent=5 // pred_region
      %s408 = ssub.s32 %s10, 2
      // Predicated region
      $region45: #{bottleneck_forward.7} parent=43 // pred_check
        %p409 = pneg %p151
      $region46: #{bottleneck_forward.7} parent=43 // pred_check_branch
        %411 = sbr.rel (%p409) target = $region48
      $region47: #{bottleneck_forward.7} parent=43 // pred_region
        %s412 = smul.u32 2, %s22
        %p413 = scmp.lt.s32.totalorder %s21, 1
        %s414 = scalar_select %p413, %s21, 1
        %p415 = scmp.lt.s32.totalorder %s412, 1
        %s416 = scalar_select %p415, %s412, 1
        %s417 = smul.addr %s414, 4
        %s418 = sadd.s32 %s416, %s417
        %s419 = smul.addr %s418, 8
        %s420 = scalar_lea.vmem %s4, %s419
      $region48: #{bottleneck_forward.7} parent=43 // pred_fallthru
        _
    $region44: #{bottleneck_forward.7} parent=5 // pred_fallthru
      _
  $region6: #{bottleneck_forward.7} parent=0 // loop_footer
    %s14 = sadd.s32 1, %s10
  $region7: #{bottleneck_forward.7} parent=0 // loop_footer_branch
    %9 = sbr.rel target = $region3
  $region8: #{bottleneck_forward.7} parent=0 // loop_exit
    _

// kernel: bottleneck_forward.6
$region0: #{bottleneck_forward.6}
  #allocation0 [shape = 'u32[]', space=smem, size = 0x4, offset = 0x4, fixed_abs, tag = 'smem constant byte address 0x4 - core index']
  #allocation1 [shape = 'u32[144,128]{1,0:T(1,128)}', space=vmem, size = 0x12000, scoped, tag = 'internal scratch']
  %s0 = inlined_call_operand.vmem [shape: f32[2,4,256], index: 0, kind: input, shape index: {}]
  %s1 = inlined_call_operand.vmem [shape: f32[4,1], index: 1, kind: input, shape index: {}]
  %s2 = inlined_call_operand.vmem [shape: f32[4,1], index: 2, kind: input, shape index: {}]
  %s3 = inlined_call_operand.vmem [shape: f32[9,4,4], index: 3, kind: input, shape index: {}]
  %s4 = inlined_call_operand.vmem [shape: f32[2,4,256], index: 4, kind: output, shape index: {0}]
  %s5 = inlined_call_operand.vmem [shape: f32[4,1], index: 5, kind: output, shape index: {1}]
  %s6 = inlined_call_operand.vmem [shape: f32[4,4], index: 6, kind: output, shape index: {2}]
  %7 = xla_tuple %s4, %s5, %s6
  %s8 = sld [smem:[#allocation0]]
  $region69: #{bottleneck_forward.6} parent=0
    _
  %s10 = ssub.s32 1, %s8
  %s11 = scalar_select 0, %s10, %s8
  loop: start=0, step=1, limit=4
  $region2: #{bottleneck_forward.6} parent=0 // loop_pre_header
    _
  $region3: #{bottleneck_forward.6} parent=0 // loop_header
    %s13 = sphi 0, %s17
    %p14 = scmp.ge.s32.totalorder %s13, 4
    %s23 = sphi 0, %s25
    %s26 = sphi 0, %s23
    %s27 = sphi 0, %s26
    %s43 = sphi 0, %s27
    %s47 = sphi 0, %s47
    %s49 = sphi 0, %s47
    %s50 = sphi 0, %s49
    %s64 = sphi 0, %s50
    %s68 = sphi 0, %s68
    %s70 = sphi 0, %s68
    %s71 = sphi 0, %s70
    %s85 = sphi 0, %s71
    %s89 = sphi 0, %s89
    %s91 = sphi 0, %s89
    %s92 = sphi 0, %s91
    %s106 = sphi 0, %s92
    %s112 = sphi 0, %s114
    %s115 = sphi 0, %s112
    %s116 = sphi 0, %s115
    %s132 = sphi 0, %s116
    %s136 = sphi 0, %s136
    %s138 = sphi 0, %s136
    %s139 = sphi 0, %s138
    %s153 = sphi 0, %s139
    %s157 = sphi 0, %s157
    %s159 = sphi 0, %s157
    %s160 = sphi 0, %s159
    %s174 = sphi 0, %s160
  $region4: #{bottleneck_forward.6} parent=0 // loop_header_branch
    %16 = sbr.rel (%p14) target = $region8
  $region5: #{bottleneck_forward.6} parent=0 // loop_body
    %s18 = ssub.s32 %s13, 1
    %s19 = ssub.s32 %s13, 2
    %s20 = sadd.s32 %s13, 1
    %s21 = ssub.s32 %s13, %s20
    %p22 = scmp.eq.s32.totalorder %s21, 0
    %s24 = sadd.s32 %s23, 1
    %s25 = scalar_select %p22, %s23, %s24
    %p28 = pneg %p22
    %p29 = scmp.eq.s32.totalorder %s13, 1
    %p30 = por %p28, %p29
    %p31 = scmp.ne.s32.totalorder %s23, %s26
    %p32 = scmp.eq.s32.totalorder %s13, 0
    %p33 = por %p31, %p32
    %p34 = scmp.ne.s32.totalorder %s23, %s26
    %p35 = scmp.eq.s32.totalorder %s18, 1
    %p36 = por %p34, %p35
    %p37 = scmp.ne.s32.totalorder %s26, %s27
    %p38 = scmp.eq.s32.totalorder %s18, 0
    %p39 = por %p37, %p38
    %p40 = scmp.ne.s32.totalorder %s26, %s27
    %p41 = scmp.eq.s32.totalorder %s19, 1
    %p42 = por %p40, %p41
    %p44 = scmp.ne.s32.totalorder %s27, %s43
    %p45 = scmp.eq.s32.totalorder %s19, 0
    %p46 = por %p44, %p45
    %s48 = sadd.s32 %s47, 1
    %p51 = scmp.eq.s32.totalorder %s13, 1
    %p52 = scmp.ne.s32.totalorder %s47, %s49
    %p53 = scmp.eq.s32.totalorder %s13, 0
    %p54 = por %p52, %p53
    %p55 = scmp.ne.s32.totalorder %s47, %s49
    %p56 = scmp.eq.s32.totalorder %s18, 1
    %p57 = por %p55, %p56
    %p58 = scmp.ne.s32.totalorder %s49, %s50
    %p59 = scmp.eq.s32.totalorder %s18, 0
    %p60 = por %p58, %p59
    %p61 = scmp.ne.s32.totalorder %s49, %s50
    %p62 = scmp.eq.s32.totalorder %s19, 1
    %p63 = por %p61, %p62
    %p65 = scmp.ne.s32.totalorder %s50, %s64
    %p66 = scmp.eq.s32.totalorder %s19, 0
    %p67 = por %p65, %p66
    %s69 = sadd.s32 %s68, 1
    %p72 = scmp.eq.s32.totalorder %s13, 1
    %p73 = scmp.ne.s32.totalorder %s68, %s70
    %p74 = scmp.eq.s32.totalorder %s13, 0
    %p75 = por %p73, %p74
    %p76 = scmp.ne.s32.totalorder %s68, %s70
    %p77 = scmp.eq.s32.totalorder %s18, 1
    %p78 = por %p76, %p77
    %p79 = scmp.ne.s32.totalorder %s70, %s71
    %p80 = scmp.eq.s32.totalorder %s18, 0
    %p81 = por %p79, %p80
    %p82 = scmp.ne.s32.totalorder %s70, %s71
    %p83 = scmp.eq.s32.totalorder %s19, 1
    %p84 = por %p82, %p83
    %p86 = scmp.ne.s32.totalorder %s71, %s85
    %p87 = scmp.eq.s32.totalorder %s19, 0
    %p88 = por %p86, %p87
    %s90 = sadd.s32 %s89, 1
    %p93 = scmp.eq.s32.totalorder %s13, 1
    %p94 = scmp.ne.s32.totalorder %s89, %s91
    %p95 = scmp.eq.s32.totalorder %s13, 0
    %p96 = por %p94, %p95
    %p97 = scmp.ne.s32.totalorder %s89, %s91
    %p98 = scmp.eq.s32.totalorder %s18, 1
    %p99 = por %p97, %p98
    %p100 = scmp.ne.s32.totalorder %s91, %s92
    %p101 = scmp.eq.s32.totalorder %s18, 0
    %p102 = por %p100, %p101
    %p103 = scmp.ne.s32.totalorder %s91, %s92
    %p104 = scmp.eq.s32.totalorder %s19, 1
    %p105 = por %p103, %p104
    %p107 = scmp.ne.s32.totalorder %s92, %s106
    %p108 = scmp.eq.s32.totalorder %s19, 0
    %p109 = por %p107, %p108
    %s110 = ssub.s32 %s13, %s20
    %p111 = scmp.eq.s32.totalorder %s110, 0
    %s113 = sadd.s32 %s112, 1
    %s114 = scalar_select %p111, %s112, %s113
    %p117 = pneg %p111
    %p118 = scmp.eq.s32.totalorder %s13, 1
    %p119 = por %p117, %p118
    %p120 = scmp.ne.s32.totalorder %s112, %s115
    %p121 = scmp.eq.s32.totalorder %s13, 0
    %p122 = por %p120, %p121
    %p123 = scmp.ne.s32.totalorder %s112, %s115
    %p124 = scmp.eq.s32.totalorder %s18, 1
    %p125 = por %p123, %p124
    %p126 = scmp.ne.s32.totalorder %s115, %s116
    %p127 = scmp.eq.s32.totalorder %s18, 0
    %p128 = por %p126, %p127
    %p129 = scmp.ne.s32.totalorder %s115, %s116
    %p130 = scmp.eq.s32.totalorder %s19, 1
    %p131 = por %p129, %p130
    %p133 = scmp.ne.s32.totalorder %s116, %s132
    %p134 = scmp.eq.s32.totalorder %s19, 0
    %p135 = por %p133, %p134
    %s137 = sadd.s32 %s136, 1
    %p140 = scmp.eq.s32.totalorder %s13, 1
    %p141 = scmp.ne.s32.totalorder %s136, %s138
    %p142 = scmp.eq.s32.totalorder %s13, 0
    %p143 = por %p141, %p142
    %p144 = scmp.ne.s32.totalorder %s136, %s138
    %p145 = scmp.eq.s32.totalorder %s18, 1
    %p146 = por %p144, %p145
    %p147 = scmp.ne.s32.totalorder %s138, %s139
    %p148 = scmp.eq.s32.totalorder %s18, 0
    %p149 = por %p147, %p148
    %p150 = scmp.ne.s32.totalorder %s138, %s139
    %p151 = scmp.eq.s32.totalorder %s19, 1
    %p152 = por %p150, %p151
    %p154 = scmp.ne.s32.totalorder %s139, %s153
    %p155 = scmp.eq.s32.totalorder %s19, 0
    %p156 = por %p154, %p155
    %s158 = sadd.s32 %s157, 1
    %p161 = scmp.eq.s32.totalorder %s13, 1
    %p162 = scmp.ne.s32.totalorder %s157, %s159
    %p163 = scmp.eq.s32.totalorder %s13, 0
    %p164 = por %p162, %p163
    %p165 = scmp.ne.s32.totalorder %s157, %s159
    %p166 = scmp.eq.s32.totalorder %s18, 1
    %p167 = por %p165, %p166
    %p168 = scmp.ne.s32.totalorder %s159, %s160
    %p169 = scmp.eq.s32.totalorder %s18, 0
    %p170 = por %p168, %p169
    %p171 = scmp.ne.s32.totalorder %s159, %s160
    %p172 = scmp.eq.s32.totalorder %s19, 1
    %p173 = por %p171, %p172
    %p175 = scmp.ne.s32.totalorder %s160, %s174
    %p176 = scmp.eq.s32.totalorder %s19, 0
    %p177 = por %p175, %p176
    %p178 = scmp.le.s32.totalorder 1, %s13
    %p179 = scmp.lt.s32.totalorder %s13, 3
    %p180 = pnand %p178, %p179
    %p181 = pneg %p180
    // Predicated region
    $region9: #{bottleneck_forward.6} parent=5 // pred_check
      _
    $region10: #{bottleneck_forward.6} parent=5 // pred_check_branch
      %183 = sbr.rel (%p180) target = $region12
    $region11: #{bottleneck_forward.6} parent=5 // pred_region
      %s184 = ssub.s32 %s13, 1
      // Predicated region
      $region13: #{bottleneck_forward.6} parent=11 // pred_check
        %p185 = pneg %p60
      $region14: #{bottleneck_forward.6} parent=11 // pred_check_branch
        %187 = sbr.rel (%p185) target = $region16
      $region15: #{bottleneck_forward.6} parent=11 // pred_region
        _
      $region16: #{bottleneck_forward.6} parent=11 // pred_fallthru
        _
      // Predicated region
      $region17: #{bottleneck_forward.6} parent=11 // pred_check
        %p188 = pneg %p81
      $region18: #{bottleneck_forward.6} parent=11 // pred_check_branch
        %190 = sbr.rel (%p188) target = $region20
      $region19: #{bottleneck_forward.6} parent=11 // pred_region
        _
      $region20: #{bottleneck_forward.6} parent=11 // pred_fallthru
        _
      // Predicated region
      $region21: #{bottleneck_forward.6} parent=11 // pred_check
        %p191 = pneg %p102
      $region22: #{bottleneck_forward.6} parent=11 // pred_check_branch
        %193 = sbr.rel (%p191) target = $region24
      $region23: #{bottleneck_forward.6} parent=11 // pred_region
        _
      $region24: #{bottleneck_forward.6} parent=11 // pred_fallthru
        _
    $region12: #{bottleneck_forward.6} parent=5 // pred_fallthru
      _
    %p194 = scmp.lt.s32.totalorder %s13, 2
    // Predicated region
    $region25: #{bottleneck_forward.6} parent=5 // pred_check
      %p195 = pneg %p194
    $region26: #{bottleneck_forward.6} parent=5 // pred_check_branch
      %197 = sbr.rel (%p195) target = $region28
    $region27: #{bottleneck_forward.6} parent=5 // pred_region
      // Predicated region
      $region29: #{bottleneck_forward.6} parent=27 // pred_check
        %p198 = pneg %p33
      $region30: #{bottleneck_forward.6} parent=27 // pred_check_branch
        %200 = sbr.rel (%p198) target = $region32
      $region31: #{bottleneck_forward.6} parent=27 // pred_region
        %p201 = scmp.lt.s32.totalorder %s13, 1
        %s202 = scalar_select %p201, %s13, 1
        %s203 = smul.addr %s202, 2
        %s204 = smul.addr %s203, 4
        %s205 = scalar_lea.vmem %s0, %s204
      $region32: #{bottleneck_forward.6} parent=27 // pred_fallthru
        _
    $region28: #{bottleneck_forward.6} parent=5 // pred_fallthru
      _
    %p206 = scmp.le.s32.totalorder 1, %s13
    %p207 = scmp.lt.s32.totalorder %s13, 3
    %p208 = pnand %p206, %p207
    %p209 = pneg %p208
    // Predicated region
    $region33: #{bottleneck_forward.6} parent=5 // pred_check
      _
    $region34: #{bottleneck_forward.6} parent=5 // pred_check_branch
      %211 = sbr.rel (%p208) target = $region36
    $region35: #{bottleneck_forward.6} parent=5 // pred_region
      %s212 = ssub.s32 %s13, 1
      %p213 = scmp.lt.s32.totalorder %s18, 1
      %s214 = scalar_select %p213, %s18, 1
      %s215 = smul.addr %s214, 2
      %s216 = smul.addr %s215, 4
      %s217 = scalar_lea.vmem %s0, %s216
      %p218 = pneg %p39
      %p219 = pneg %p36
      %p220 = pneg %p60
      %p221 = pneg %p57
      %p222 = pneg %p81
      %p223 = pneg %p78
      %p224 = pneg %p102
      %p225 = pneg %p99
      %p226 = pneg %p128
      %p227 = pneg %p125
      %p228 = scmp.lt.s32.totalorder %s18, 1
      %s229 = scalar_select %p228, %s18, 1
      %s230 = smul.addr %s229, 2
      %s231 = smul.addr %s230, 4
      %s232 = scalar_lea.vmem %s4, %s231
      %p233 = pneg %p149
      %p234 = pneg %p146
      %p235 = pneg %p170
      %p236 = pneg %p167
      %p237 = scmp.lt.s32.totalorder %s18, 1
      %s238 = scalar_select %p237, %s18, 1
      %s239 = smul.addr %s238, 2
      %s240 = smul.addr %s239, 4
      %s241 = scalar_lea.vmem %s0, %s240
      %p242 = scmp.lt.s32.totalorder %s18, 1
      %s243 = scalar_select %p242, %s18, 1
      %s244 = smul.addr %s243, 2
      %s245 = smul.addr %s244, 4
      %s246 = scalar_lea.vmem %s4, %s245
      %p247 = scmp.eq.s32.totalorder %s18, 0
      // Predicated region
      $region37: #{bottleneck_forward.6} parent=35 // pred_check
        %p248 = pneg %p247
      $region38: #{bottleneck_forward.6} parent=35 // pred_check_branch
        %250 = sbr.rel (%p248) target = $region40
      $region39: #{bottleneck_forward.6} parent=35 // pred_region
        %vm251 = vcmask 3072
        %252 = vst.msk [vmem:[%s5] sm:$0xf] %vm251, 0.0
        %vm253 = vcmask 27648
        %254 = vst.msk [vmem:[%s6] sm:$0xf] %vm253, 0.0
      $region40: #{bottleneck_forward.6} parent=35 // pred_fallthru
        _
      %v255 = vld [vmem:[%s241] sm:$0xff]
      %v256 = vld [vmem:[%s1] sm:$0xf]
      %258 = vset.pattern.permute.xlu0 0
      %259 = vperm.xlu0 %258, %v256
      %v260 = vpop.permute.xlu0 %259
      %v262 = vunpack.c.l.s4 839922192
      %v263 = vunpack.c.0.s8 %v262
      %v264 = vlaneseq
      %v265 = vshrl.u32 %v264, 7
      %v266 = vsub.s32 %v263, %v265
      %v267 = vrot.slane %v260, %v266
      %v269 = vmul.f32 %v255, %v267
      %v270 = vld [vmem:[%s2] sm:$0xf]
      %272 = vset.pattern.permute.xlu0 0
      %273 = vperm.xlu0 %272, %v270
      %v274 = vpop.permute.xlu0 %273
      %v276 = vunpack.c.l.s4 839922192
      %v277 = vunpack.c.0.s8 %v276
      %v278 = vlaneseq
      %v279 = vshrl.u32 %v278, 7
      %v280 = vsub.s32 %v277, %v279
      %v281 = vrot.slane %v274, %v280
      %v283 = vadd.f32 %v269, %v281
      %v285 = vcombine.high %v283, %v283
      %286 = vrot.lane.b32.xlu0 %v283, 17
      %v287 = vpop.permute.xlu0 %286
      %288 = vrot.lane.b32.xlu0 %v285, 17
      %v289 = vpop.permute.xlu0 %288
      %vm290 = vcmask 138240
      %v291 = vsel %vm290, %v287, %v289
      %v295 = vsel %vm290, 0.0, %v287
      %v296 = vsel %vm290, %v289, 0.0
      %v297 = vlaneseq
      %v298 = vand.u32 %v297, 127
      %v299 = vadd.s32 %v298, 128
      %vm300 = vcmp.lt.s32.totalorder %v298, 0
      %v301 = vsub.s32 0, %v298
      %v302 = vsel %vm300, %v301, %v298
      %v303 = vshrl.u32 %v302, 4
      %v304 = vand.u32 %v302, 15
      %v305 = vsub.s32 0, %v304
      %v306 = vsel %vm300, %v305, %v304
      %vm307 = vcmp.lt.s32.totalorder %v299, 0
      %v308 = vsub.s32 0, %v299
      %v309 = vsel %vm307, %v308, %v299
      %v310 = vshrl.u32 %v309, 4
      %v311 = vand.u32 %v309, 15
      %v312 = vsub.s32 0, %v311
      %v313 = vsel %vm307, %v312, %v311
      %vm314 = vcmp.ne.s32.totalorder %v306, 0
      %vm315 = vcmp.ne.s32.totalorder %v313, 0
      %vm316 = vcmp.lt.s32.totalorder %v306, 0
      %vm317 = vcmp.lt.s32.totalorder %v313, 0
      %vm318 = vmand %vm316, %vm314
      %vm319 = vmand %vm317, %vm315
      %v320 = vadd.s32 %v306, 16
      %v321 = vadd.s32 %v313, 16
      %v322 = vsel %vm318, %v320, %v306
      %v323 = vsel %vm319, %v321, %v313
      %vm324 = vcmp.ge.s32.totalorder %v322, 1
      %vm325 = vcmp.ge.s32.totalorder %v323, 1
      %v326 = vsel %vm324, 1, 0
      %v327 = vsel %vm325, 1, 0
      %vm328 = vcmp.eq.s32.totalorder %v326, 1
      %vm329 = vcmp.eq.s32.totalorder %v327, 1
      %v330 = vsel %vm328, %v295, 0.0
      %v331 = vsel %vm329, %v291, 0.0
      %v332 = vld [vmem:[%s3] sm:$0xf]
      %s333 = scalar_lea.vmem %s3, 4
      %v334 = vld [vmem:[%s333] sm:$0xf]
      %337 = vrot.lane.b32.xlu0 %v295, 127
      %v338 = vpop.permute.xlu0 %337
      %339 = vrot.lane.b32.xlu0 %v291, 127
      %v340 = vpop.permute.xlu0 %339
      %341 = vrot.lane.b32.xlu0 %v296, 127
      %v342 = vpop.permute.xlu0 %341
      %vm343 = vcmask 1039360
      %v344 = vsel %vm343, %v338, %v340
      %v345 = vsel %vm343, %v340, %v342
      %vm346 = vcmask 31744
      %v348 = vsel %vm346, %v334, 0
      %vm350 = vcmask 1043456
      %v351 = vsel %vm350, %v344, 0
      %v353 = vsel %vm350, %v345, 0
      %355 = vmatprep.subr.mxu0 %v353
      %356 = vmatpush1.msra.mxu0 %v351
      %357 = vmatprep.subr.mxu0 0.0
      %358 = vmatpush1.msra.mxu0 0.0
      %359 = vmatprep.subr.mxu0 0.0
      %360 = vmatpush1.msra.mxu0 0.0
      %361 = vmatprep.subr.mxu0 0.0
      %362 = vmatpush1.msra.mxu0 0.0
      %363 = vmatprep.subr.mxu0 0.0
      %364 = vmatpush1.msra.mxu0 0.0
      %365 = vmatprep.subr.mxu0 0.0
      %366 = vmatpush1.msra.mxu0 0.0
      %367 = vmatprep.subr.mxu0 0.0
      %368 = vmatpush1.msra.mxu0 0.0
      %369 = vmatprep.subr.mxu0 0.0
      %370 = vmatpush1.msra.mxu0 0.0
      %371 = vmatprep.subr.mxu0 0.0
      %372 = vmatpush1.msra.mxu0 0.0
      %373 = vmatprep.subr.mxu0 0.0
      %374 = vmatpush1.msra.mxu0 0.0
      %375 = vmatprep.subr.mxu0 0.0
      %376 = vmatpush1.msra.mxu0 0.0
      %377 = vmatprep.subr.mxu0 0.0
      %378 = vmatpush1.msra.mxu0 0.0
      %379 = vmatprep.subr.mxu0 0.0
      %380 = vmatpush1.msra.mxu0 0.0
      %381 = vmatprep.subr.mxu0 0.0
      %382 = vmatpush1.msra.mxu0 0.0
      %383 = vmatprep.subr.mxu0 0.0
      %384 = vmatpush1.msra.mxu0 0.0
      %385 = vmatprep.subr.mxu0 0.0
      %386 = vmatpush1.msra.mxu0 0.0
      %387 = vmatprep.subr.mxu0 0.0
      %388 = vmatpush1.msra.mxu0 0.0
      %389 = vmatprep.subr.mxu0 0.0
      %390 = vmatpush1.msra.mxu0 0.0
      %391 = vmatprep.subr.mxu0 0.0
      %392 = vmatpush1.msra.mxu0 0.0
      %393 = vmatprep.subr.mxu0 0.0
      %394 = vmatpush1.msra.mxu0 0.0
      %395 = vmatprep.subr.mxu0 0.0
      %396 = vmatpush1.msra.mxu0 0.0
      %397 = vmatprep.subr.mxu0 0.0
      %398 = vmatpush1.msra.mxu0 0.0
      %399 = vmatprep.subr.mxu0 0.0
      %400 = vmatpush1.msra.mxu0 0.0
      %401 = vmatprep.subr.mxu0 0.0
      %402 = vmatpush1.msra.mxu0 0.0
      %403 = vmatprep.subr.mxu0 0.0
      %404 = vmatpush1.msra.mxu0 0.0
      %405 = vmatprep.subr.mxu0 0.0
      %406 = vmatpush1.msra.mxu0 0.0
      %407 = vmatprep.subr.mxu0 0.0
      %408 = vmatpush1.msra.mxu0 0.0
      %409 = vmatprep.subr.mxu0 0.0
      %410 = vmatpush1.msra.mxu0 0.0
      %411 = vmatprep.subr.mxu0 0.0
      %412 = vmatpush1.msra.mxu0 0.0
      %413 = vmatprep.subr.mxu0 0.0
      %414 = vmatpush1.msra.mxu0 0.0
      %415 = vmatprep.subr.mxu0 0.0
      %416 = vmatpush1.msra.mxu0 0.0
      %417 = vmatprep.subr.mxu0 0.0
      %418 = vmatpush1.msra.mxu0 0.0
      %419 = vmatprep.mubr.f32.mxu0 0.0
      %420 = vmatmul.mubr.f32.gmra.mrb[0].mxu0 %v348
      %v421 = vpop.f32.mrb[0].mxu0
      %v422 = vadd.f32 0.0, %v421
      %v423 = vpop.f32.mrb[0].mxu0
      %v424 = vadd.f32 0.0, %v423
      %425 = vdwg.mxu0
      %v427 = vsel %vm346, %v332, 0
      %v430 = vsel %vm350, %v330, 0
      %v433 = vsel %vm350, %v331, 0
      %435 = vmatprep.subr.mxu0 %v433
      %436 = vmatpush1.msra.mxu0 %v430
      %437 = vmatprep.subr.mxu0 0.0
      %438 = vmatpush1.msra.mxu0 0.0
      %439 = vmatprep.subr.mxu0 0.0
      %440 = vmatpush1.msra.mxu0 0.0
      %441 = vmatprep.subr.mxu0 0.0
      %442 = vmatpush1.msra.mxu0 0.0
      %443 = vmatprep.subr.mxu0 0.0
      %444 = vmatpush1.msra.mxu0 0.0
      %445 = vmatprep.subr.mxu0 0.0
      %446 = vmatpush1.msra.mxu0 0.0
      %447 = vmatprep.subr.mxu0 0.0
      %448 = vmatpush1.msra.mxu0 0.0
      %449 = vmatprep.subr.mxu0 0.0
      %450 = vmatpush1.msra.mxu0 0.0
      %451 = vmatprep.subr.mxu0 0.0
      %452 = vmatpush1.msra.mxu0 0.0
      %453 = vmatprep.subr.mxu0 0.0
      %454 = vmatpush1.msra.mxu0 0.0
      %455 = vmatprep.subr.mxu0 0.0
      %456 = vmatpush1.msra.mxu0 0.0
      %457 = vmatprep.subr.mxu0 0.0
      %458 = vmatpush1.msra.mxu0 0.0
      %459 = vmatprep.subr.mxu0 0.0
      %460 = vmatpush1.msra.mxu0 0.0
      %461 = vmatprep.subr.mxu0 0.0
      %462 = vmatpush1.msra.mxu0 0.0
      %463 = vmatprep.subr.mxu0 0.0
      %464 = vmatpush1.msra.mxu0 0.0
      %465 = vmatprep.subr.mxu0 0.0
      %466 = vmatpush1.msra.mxu0 0.0
      %467 = vmatprep.subr.mxu0 0.0
      %468 = vmatpush1.msra.mxu0 0.0
      %469 = vmatprep.subr.mxu0 0.0
      %470 = vmatpush1.msra.mxu0 0.0
      %471 = vmatprep.subr.mxu0 0.0
      %472 = vmatpush1.msra.mxu0 0.0
      %473 = vmatprep.subr.mxu0 0.0
      %474 = vmatpush1.msra.mxu0 0.0
      %475 = vmatprep.subr.mxu0 0.0
      %476 = vmatpush1.msra.mxu0 0.0
      %477 = vmatprep.subr.mxu0 0.0
      %478 = vmatpush1.msra.mxu0 0.0
      %479 = vmatprep.subr.mxu0 0.0
      %480 = vmatpush1.msra.mxu0 0.0
      %481 = vmatprep.subr.mxu0 0.0
      %482 = vmatpush1.msra.mxu0 0.0
      %483 = vmatprep.subr.mxu0 0.0
      %484 = vmatpush1.msra.mxu0 0.0
      %485 = vmatprep.subr.mxu0 0.0
      %486 = vmatpush1.msra.mxu0 0.0
      %487 = vmatprep.subr.mxu0 0.0
      %488 = vmatpush1.msra.mxu0 0.0
      %489 = vmatprep.subr.mxu0 0.0
      %490 = vmatpush1.msra.mxu0 0.0
      %491 = vmatprep.subr.mxu0 0.0
      %492 = vmatpush1.msra.mxu0 0.0
      %493 = vmatprep.subr.mxu0 0.0
      %494 = vmatpush1.msra.mxu0 0.0
      %495 = vmatprep.subr.mxu0 0.0
      %496 = vmatpush1.msra.mxu0 0.0
      %497 = vmatprep.subr.mxu0 0.0
      %498 = vmatpush1.msra.mxu0 0.0
      %499 = vmatprep.mubr.f32.mxu0 0.0
      %500 = vmatmul.mubr.f32.gmra.mrb[0].mxu0 %v427
      %v501 = vpop.f32.mrb[0].mxu0
      %v502 = vadd.f32 %v422, %v501
      %v503 = vpop.f32.mrb[0].mxu0
      %v504 = vadd.f32 %v424, %v503
      %505 = vdwg.mxu0
      %vm506 = vcmp.le.s32.totalorder %v322, 14
      %vm507 = vcmp.le.s32.totalorder %v323, 14
      %v508 = vsel %vm506, 1, 0
      %v509 = vsel %vm507, 1, 0
      %vm510 = vcmp.eq.s32.totalorder %v508, 1
      %vm511 = vcmp.eq.s32.totalorder %v509, 1
      %512 = vrot.lane.b32.xlu0 %v295, 126
      %v513 = vpop.permute.xlu0 %512
      %514 = vrot.lane.b32.xlu0 %v291, 126
      %v515 = vpop.permute.xlu0 %514
      %516 = vrot.lane.b32.xlu0 %v296, 126
      %v517 = vpop.permute.xlu0 %516
      %vm518 = vcmask 1031168
      %v519 = vsel %vm518, %v513, %v515
      %v520 = vsel %vm518, %v515, %v517
      %v523 = vsel %vm510, %v519, 0.0
      %v524 = vsel %vm511, %v520, 0.0
      %s525 = scalar_lea.vmem %s3, 8
      %v526 = vld [vmem:[%s525] sm:$0xf]
      %v528 = vsel %vm346, %v526, 0
      %v531 = vsel %vm350, %v523, 0
      %v534 = vsel %vm350, %v524, 0
      %536 = vmatprep.subr.mxu0 %v534
      %537 = vmatpush1.msra.mxu0 %v531
      %538 = vmatprep.subr.mxu0 0.0
      %539 = vmatpush1.msra.mxu0 0.0
      %540 = vmatprep.subr.mxu0 0.0
      %541 = vmatpush1.msra.mxu0 0.0
      %542 = vmatprep.subr.mxu0 0.0
      %543 = vmatpush1.msra.mxu0 0.0
      %544 = vmatprep.subr.mxu0 0.0
      %545 = vmatpush1.msra.mxu0 0.0
      %546 = vmatprep.subr.mxu0 0.0
      %547 = vmatpush1.msra.mxu0 0.0
      %548 = vmatprep.subr.mxu0 0.0
      %549 = vmatpush1.msra.mxu0 0.0
      %550 = vmatprep.subr.mxu0 0.0
      %551 = vmatpush1.msra.mxu0 0.0
      %552 = vmatprep.subr.mxu0 0.0
      %553 = vmatpush1.msra.mxu0 0.0
      %554 = vmatprep.subr.mxu0 0.0
      %555 = vmatpush1.msra.mxu0 0.0
      %556 = vmatprep.subr.mxu0 0.0
      %557 = vmatpush1.msra.mxu0 0.0
      %558 = vmatprep.subr.mxu0 0.0
      %559 = vmatpush1.msra.mxu0 0.0
      %560 = vmatprep.subr.mxu0 0.0
      %561 = vmatpush1.msra.mxu0 0.0
      %562 = vmatprep.subr.mxu0 0.0
      %563 = vmatpush1.msra.mxu0 0.0
      %564 = vmatprep.subr.mxu0 0.0
      %565 = vmatpush1.msra.mxu0 0.0
      %566 = vmatprep.subr.mxu0 0.0
      %567 = vmatpush1.msra.mxu0 0.0
      %568 = vmatprep.subr.mxu0 0.0
      %569 = vmatpush1.msra.mxu0 0.0
      %570 = vmatprep.subr.mxu0 0.0
      %571 = vmatpush1.msra.mxu0 0.0
      %572 = vmatprep.subr.mxu0 0.0
      %573 = vmatpush1.msra.mxu0 0.0
      %574 = vmatprep.subr.mxu0 0.0
      %575 = vmatpush1.msra.mxu0 0.0
      %576 = vmatprep.subr.mxu0 0.0
      %577 = vmatpush1.msra.mxu0 0.0
      %578 = vmatprep.subr.mxu0 0.0
      %579 = vmatpush1.msra.mxu0 0.0
      %580 = vmatprep.subr.mxu0 0.0
      %581 = vmatpush1.msra.mxu0 0.0
      %582 = vmatprep.subr.mxu0 0.0
      %583 = vmatpush1.msra.mxu0 0.0
      %584 = vmatprep.subr.mxu0 0.0
      %585 = vmatpush1.msra.mxu0 0.0
      %586 = vmatprep.subr.mxu0 0.0
      %587 = vmatpush1.msra.mxu0 0.0
      %588 = vmatprep.subr.mxu0 0.0
      %589 = vmatpush1.msra.mxu0 0.0
      %590 = vmatprep.subr.mxu0 0.0
      %591 = vmatpush1.msra.mxu0 0.0
      %592 = vmatprep.subr.mxu0 0.0
      %593 = vmatpush1.msra.mxu0 0.0
      %594 = vmatprep.subr.mxu0 0.0
      %595 = vmatpush1.msra.mxu0 0.0
      %596 = vmatprep.subr.mxu0 0.0
      %597 = vmatpush1.msra.mxu0 0.0
      %598 = vmatprep.subr.mxu0 0.0
      %599 = vmatpush1.msra.mxu0 0.0
      %600 = vmatprep.mubr.f32.mxu0 0.0
      %601 = vmatmul.mubr.f32.gmra.mrb[0].mxu0 %v528
      %v602 = vpop.f32.mrb[0].mxu0
      %v603 = vadd.f32 0.0, %v602
      %v604 = vpop.f32.mrb[0].mxu0
      %v605 = vadd.f32 0.0, %v604
      %606 = vdwg.mxu0
      %v607 = vadd.f32 %v502, %v603
      %v608 = vadd.f32 %v504, %v605
      %609 = vrot.lane.b32.xlu0 %v295, 112
      %v610 = vpop.permute.xlu0 %609
      %611 = vrot.lane.b32.xlu0 %v291, 112
      %v612 = vpop.permute.xlu0 %611
      %613 = vrot.lane.b32.xlu0 %v296, 112
      %v614 = vpop.permute.xlu0 %613
      %vm615 = vcmask 916480
      %v616 = vsel %vm615, %v610, %v612
      %v617 = vsel %vm615, %v612, %v614
      %v620 = vsel %vm328, %v616, 0.0
      %v621 = vsel %vm329, %v617, 0.0
      %s622 = scalar_lea.vmem %s3, 12
      %v623 = vld [vmem:[%s622] sm:$0xf]
      %v625 = vsel %vm346, %v623, 0
      %v628 = vsel %vm350, %v620, 0
      %v631 = vsel %vm350, %v621, 0
      %633 = vmatprep.subr.mxu0 %v631
      %634 = vmatpush1.msra.mxu0 %v628
      %635 = vmatprep.subr.mxu0 0.0
      %636 = vmatpush1.msra.mxu0 0.0
      %637 = vmatprep.subr.mxu0 0.0
      %638 = vmatpush1.msra.mxu0 0.0
      %639 = vmatprep.subr.mxu0 0.0
      %640 = vmatpush1.msra.mxu0 0.0
      %641 = vmatprep.subr.mxu0 0.0
      %642 = vmatpush1.msra.mxu0 0.0
      %643 = vmatprep.subr.mxu0 0.0
      %644 = vmatpush1.msra.mxu0 0.0
      %645 = vmatprep.subr.mxu0 0.0
      %646 = vmatpush1.msra.mxu0 0.0
      %647 = vmatprep.subr.mxu0 0.0
      %648 = vmatpush1.msra.mxu0 0.0
      %649 = vmatprep.subr.mxu0 0.0
      %650 = vmatpush1.msra.mxu0 0.0
      %651 = vmatprep.subr.mxu0 0.0
      %652 = vmatpush1.msra.mxu0 0.0
      %653 = vmatprep.subr.mxu0 0.0
      %654 = vmatpush1.msra.mxu0 0.0
      %655 = vmatprep.subr.mxu0 0.0
      %656 = vmatpush1.msra.mxu0 0.0
      %657 = vmatprep.subr.mxu0 0.0
      %658 = vmatpush1.msra.mxu0 0.0
      %659 = vmatprep.subr.mxu0 0.0
      %660 = vmatpush1.msra.mxu0 0.0
      %661 = vmatprep.subr.mxu0 0.0
      %662 = vmatpush1.msra.mxu0 0.0
      %663 = vmatprep.subr.mxu0 0.0
      %664 = vmatpush1.msra.mxu0 0.0
      %665 = vmatprep.subr.mxu0 0.0
      %666 = vmatpush1.msra.mxu0 0.0
      %667 = vmatprep.subr.mxu0 0.0
      %668 = vmatpush1.msra.mxu0 0.0
      %669 = vmatprep.subr.mxu0 0.0
      %670 = vmatpush1.msra.mxu0 0.0
      %671 = vmatprep.subr.mxu0 0.0
      %672 = vmatpush1.msra.mxu0 0.0
      %673 = vmatprep.subr.mxu0 0.0
      %674 = vmatpush1.msra.mxu0 0.0
      %675 = vmatprep.subr.mxu0 0.0
      %676 = vmatpush1.msra.mxu0 0.0
      %677 = vmatprep.subr.mxu0 0.0
      %678 = vmatpush1.msra.mxu0 0.0
      %679 = vmatprep.subr.mxu0 0.0
      %680 = vmatpush1.msra.mxu0 0.0
      %681 = vmatprep.subr.mxu0 0.0
      %682 = vmatpush1.msra.mxu0 0.0
      %683 = vmatprep.subr.mxu0 0.0
      %684 = vmatpush1.msra.mxu0 0.0
      %685 = vmatprep.subr.mxu0 0.0
      %686 = vmatpush1.msra.mxu0 0.0
      %687 = vmatprep.subr.mxu0 0.0
      %688 = vmatpush1.msra.mxu0 0.0
      %689 = vmatprep.subr.mxu0 0.0
      %690 = vmatpush1.msra.mxu0 0.0
      %691 = vmatprep.subr.mxu0 0.0
      %692 = vmatpush1.msra.mxu0 0.0
      %693 = vmatprep.subr.mxu0 0.0
      %694 = vmatpush1.msra.mxu0 0.0
      %695 = vmatprep.subr.mxu0 0.0
      %696 = vmatpush1.msra.mxu0 0.0
      %697 = vmatprep.mubr.f32.mxu0 0.0
      %698 = vmatmul.mubr.f32.gmra.mrb[0].mxu0 %v625
      %v699 = vpop.f32.mrb[0].mxu0
      %v700 = vadd.f32 0.0, %v699
      %v701 = vpop.f32.mrb[0].mxu0
      %v702 = vadd.f32 0.0, %v701
      %703 = vdwg.mxu0
      %v704 = vadd.f32 %v607, %v700
      %v705 = vadd.f32 %v608, %v702
      %s706 = scalar_lea.vmem %s3, 16
      %v707 = vld [vmem:[%s706] sm:$0xf]
      %708 = vrot.lane.b32.xlu0 %v295, 111
      %v709 = vpop.permute.xlu0 %708
      %710 = vrot.lane.b32.xlu0 %v291, 111
      %v711 = vpop.permute.xlu0 %710
      %712 = vrot.lane.b32.xlu0 %v296, 111
      %v713 = vpop.permute.xlu0 %712
      %vm714 = vcmask 908288
      %v715 = vsel %vm714, %v709, %v711
      %v716 = vsel %vm714, %v711, %v713
      %v718 = vsel %vm346, %v707, 0
      %v720 = vsel %vm350, %v715, 0
      %v722 = vsel %vm350, %v716, 0
      %724 = vmatprep.subr.mxu0 %v722
      %725 = vmatpush1.msra.mxu0 %v720
      %726 = vmatprep.subr.mxu0 0.0
      %727 = vmatpush1.msra.mxu0 0.0
      %728 = vmatprep.subr.mxu0 0.0
      %729 = vmatpush1.msra.mxu0 0.0
      %730 = vmatprep.subr.mxu0 0.0
      %731 = vmatpush1.msra.mxu0 0.0
      %732 = vmatprep.subr.mxu0 0.0
      %733 = vmatpush1.msra.mxu0 0.0
      %734 = vmatprep.subr.mxu0 0.0
      %735 = vmatpush1.msra.mxu0 0.0
      %736 = vmatprep.subr.mxu0 0.0
      %737 = vmatpush1.msra.mxu0 0.0
      %738 = vmatprep.subr.mxu0 0.0
      %739 = vmatpush1.msra.mxu0 0.0
      %740 = vmatprep.subr.mxu0 0.0
      %741 = vmatpush1.msra.mxu0 0.0
      %742 = vmatprep.subr.mxu0 0.0
      %743 = vmatpush1.msra.mxu0 0.0
      %744 = vmatprep.subr.mxu0 0.0
      %745 = vmatpush1.msra.mxu0 0.0
      %746 = vmatprep.subr.mxu0 0.0
      %747 = vmatpush1.msra.mxu0 0.0
      %748 = vmatprep.subr.mxu0 0.0
      %749 = vmatpush1.msra.mxu0 0.0
      %750 = vmatprep.subr.mxu0 0.0
      %751 = vmatpush1.msra.mxu0 0.0
      %752 = vmatprep.subr.mxu0 0.0
      %753 = vmatpush1.msra.mxu0 0.0
      %754 = vmatprep.subr.mxu0 0.0
      %755 = vmatpush1.msra.mxu0 0.0
      %756 = vmatprep.subr.mxu0 0.0
      %757 = vmatpush1.msra.mxu0 0.0
      %758 = vmatprep.subr.mxu0 0.0
      %759 = vmatpush1.msra.mxu0 0.0
      %760 = vmatprep.subr.mxu0 0.0
      %761 = vmatpush1.msra.mxu0 0.0
      %762 = vmatprep.subr.mxu0 0.0
      %763 = vmatpush1.msra.mxu0 0.0
      %764 = vmatprep.subr.mxu0 0.0
      %765 = vmatpush1.msra.mxu0 0.0
      %766 = vmatprep.subr.mxu0 0.0
      %767 = vmatpush1.msra.mxu0 0.0
      %768 = vmatprep.subr.mxu0 0.0
      %769 = vmatpush1.msra.mxu0 0.0
      %770 = vmatprep.subr.mxu0 0.0
      %771 = vmatpush1.msra.mxu0 0.0
      %772 = vmatprep.subr.mxu0 0.0
      %773 = vmatpush1.msra.mxu0 0.0
      %774 = vmatprep.subr.mxu0 0.0
      %775 = vmatpush1.msra.mxu0 0.0
      %776 = vmatprep.subr.mxu0 0.0
      %777 = vmatpush1.msra.mxu0 0.0
      %778 = vmatprep.subr.mxu0 0.0
      %779 = vmatpush1.msra.mxu0 0.0
      %780 = vmatprep.subr.mxu0 0.0
      %781 = vmatpush1.msra.mxu0 0.0
      %782 = vmatprep.subr.mxu0 0.0
      %783 = vmatpush1.msra.mxu0 0.0
      %784 = vmatprep.subr.mxu0 0.0
      %785 = vmatpush1.msra.mxu0 0.0
      %786 = vmatprep.subr.mxu0 0.0
      %787 = vmatpush1.msra.mxu0 0.0
      %788 = vmatprep.mubr.f32.mxu0 0.0
      %789 = vmatmul.mubr.f32.gmra.mrb[0].mxu0 %v718
      %v790 = vpop.f32.mrb[0].mxu0
      %v791 = vadd.f32 0.0, %v790
      %v792 = vpop.f32.mrb[0].mxu0
      %v793 = vadd.f32 0.0, %v792
      %794 = vdwg.mxu0
      %v795 = vadd.f32 %v704, %v791
      %v796 = vadd.f32 %v705, %v793
      %797 = vrot.lane.b32.xlu0 %v295, 110
      %v798 = vpop.permute.xlu0 %797
      %799 = vrot.lane.b32.xlu0 %v291, 110
      %v800 = vpop.permute.xlu0 %799
      %801 = vrot.lane.b32.xlu0 %v296, 110
      %v802 = vpop.permute.xlu0 %801
      %vm803 = vcmask 900096
      %v804 = vsel %vm803, %v798, %v800
      %v805 = vsel %vm803, %v800, %v802
      %v808 = vsel %vm510, %v804, 0.0
      %v809 = vsel %vm511, %v805, 0.0
      %s810 = scalar_lea.vmem %s3, 20
      %v811 = vld [vmem:[%s810] sm:$0xf]
      %v813 = vsel %vm346, %v811, 0
      %v816 = vsel %vm350, %v808, 0
      %v819 = vsel %vm350, %v809, 0
      %821 = vmatprep.subr.mxu0 %v819
      %822 = vmatpush1.msra.mxu0 %v816
      %823 = vmatprep.subr.mxu0 0.0
      %824 = vmatpush1.msra.mxu0 0.0
      %825 = vmatprep.subr.mxu0 0.0
      %826 = vmatpush1.msra.mxu0 0.0
      %827 = vmatprep.subr.mxu0 0.0
      %828 = vmatpush1.msra.mxu0 0.0
      %829 = vmatprep.subr.mxu0 0.0
      %830 = vmatpush1.msra.mxu0 0.0
      %831 = vmatprep.subr.mxu0 0.0
      %832 = vmatpush1.msra.mxu0 0.0
      %833 = vmatprep.subr.mxu0 0.0
      %834 = vmatpush1.msra.mxu0 0.0
      %835 = vmatprep.subr.mxu0 0.0
      %836 = vmatpush1.msra.mxu0 0.0
      %837 = vmatprep.subr.mxu0 0.0
      %838 = vmatpush1.msra.mxu0 0.0
      %839 = vmatprep.subr.mxu0 0.0
      %840 = vmatpush1.msra.mxu0 0.0
      %841 = vmatprep.subr.mxu0 0.0
      %842 = vmatpush1.msra.mxu0 0.0
      %843 = vmatprep.subr.mxu0 0.0
      %844 = vmatpush1.msra.mxu0 0.0
      %845 = vmatprep.subr.mxu0 0.0
      %846 = vmatpush1.msra.mxu0 0.0
      %847 = vmatprep.subr.mxu0 0.0
      %848 = vmatpush1.msra.mxu0 0.0
      %849 = vmatprep.subr.mxu0 0.0
      %850 = vmatpush1.msra.mxu0 0.0
      %851 = vmatprep.subr.mxu0 0.0
      %852 = vmatpush1.msra.mxu0 0.0
      %853 = vmatprep.subr.mxu0 0.0
      %854 = vmatpush1.msra.mxu0 0.0
      %855 = vmatprep.subr.mxu0 0.0
      %856 = vmatpush1.msra.mxu0 0.0
      %857 = vmatprep.subr.mxu0 0.0
      %858 = vmatpush1.msra.mxu0 0.0
      %859 = vmatprep.subr.mxu0 0.0
      %860 = vmatpush1.msra.mxu0 0.0
      %861 = vmatprep.subr.mxu0 0.0
      %862 = vmatpush1.msra.mxu0 0.0
      %863 = vmatprep.subr.mxu0 0.0
      %864 = vmatpush1.msra.mxu0 0.0
      %865 = vmatprep.subr.mxu0 0.0
      %866 = vmatpush1.msra.mxu0 0.0
      %867 = vmatprep.subr.mxu0 0.0
      %868 = vmatpush1.msra.mxu0 0.0
      %869 = vmatprep.subr.mxu0 0.0
      %870 = vmatpush1.msra.mxu0 0.0
      %871 = vmatprep.subr.mxu0 0.0
      %872 = vmatpush1.msra.mxu0 0.0
      %873 = vmatprep.subr.mxu0 0.0
      %874 = vmatpush1.msra.mxu0 0.0
      %875 = vmatprep.subr.mxu0 0.0
      %876 = vmatpush1.msra.mxu0 0.0
      %877 = vmatprep.subr.mxu0 0.0
      %878 = vmatpush1.msra.mxu0 0.0
      %879 = vmatprep.subr.mxu0 0.0
      %880 = vmatpush1.msra.mxu0 0.0
      %881 = vmatprep.subr.mxu0 0.0
      %882 = vmatpush1.msra.mxu0 0.0
      %883 = vmatprep.subr.mxu0 0.0
      %884 = vmatpush1.msra.mxu0 0.0
      %885 = vmatprep.mubr.f32.mxu0 0.0
      %886 = vmatmul.mubr.f32.gmra.mrb[0].mxu0 %v813
      %v887 = vpop.f32.mrb[0].mxu0
      %v888 = vadd.f32 0.0, %v887
      %v889 = vpop.f32.mrb[0].mxu0
      %v890 = vadd.f32 0.0, %v889
      %891 = vdwg.mxu0
      %v892 = vadd.f32 %v795, %v888
      %v893 = vadd.f32 %v796, %v890
      %894 = vrot.lane.b32.xlu0 %v295, 96
      %v895 = vpop.permute.xlu0 %894
      %896 = vrot.lane.b32.xlu0 %v291, 96
      %v897 = vpop.permute.xlu0 %896
      %898 = vrot.lane.b32.xlu0 %v296, 96
      %v899 = vpop.permute.xlu0 %898
      %vm900 = vcmask 785408
      %v901 = vsel %vm900, %v895, %v897
      %v902 = vsel %vm900, %v897, %v899
      %v905 = vsel %vm328, %v901, 0.0
      %v906 = vsel %vm329, %v902, 0.0
      %s907 = scalar_lea.vmem %s3, 24
      %v908 = vld [vmem:[%s907] sm:$0xf]
      %v910 = vsel %vm346, %v908, 0
      %v913 = vsel %vm350, %v905, 0
      %v916 = vsel %vm350, %v906, 0
      %918 = vmatprep.subr.mxu0 %v916
      %919 = vmatpush1.msra.mxu0 %v913
      %920 = vmatprep.subr.mxu0 0.0
      %921 = vmatpush1.msra.mxu0 0.0
      %922 = vmatprep.subr.mxu0 0.0
      %923 = vmatpush1.msra.mxu0 0.0
      %924 = vmatprep.subr.mxu0 0.0
      %925 = vmatpush1.msra.mxu0 0.0
      %926 = vmatprep.subr.mxu0 0.0
      %927 = vmatpush1.msra.mxu0 0.0
      %928 = vmatprep.subr.mxu0 0.0
      %929 = vmatpush1.msra.mxu0 0.0
      %930 = vmatprep.subr.mxu0 0.0
      %931 = vmatpush1.msra.mxu0 0.0
      %932 = vmatprep.subr.mxu0 0.0
      %933 = vmatpush1.msra.mxu0 0.0
      %934 = vmatprep.subr.mxu0 0.0
      %935 = vmatpush1.msra.mxu0 0.0
      %936 = vmatprep.subr.mxu0 0.0
      %937 = vmatpush1.msra.mxu0 0.0
      %938 = vmatprep.subr.mxu0 0.0
      %939 = vmatpush1.msra.mxu0 0.0
      %940 = vmatprep.subr.mxu0 0.0
      %941 = vmatpush1.msra.mxu0 0.0
      %942 = vmatprep.subr.mxu0 0.0
      %943 = vmatpush1.msra.mxu0 0.0
      %944 = vmatprep.subr.mxu0 0.0
      %945 = vmatpush1.msra.mxu0 0.0
      %946 = vmatprep.subr.mxu0 0.0
      %947 = vmatpush1.msra.mxu0 0.0
      %948 = vmatprep.subr.mxu0 0.0
      %949 = vmatpush1.msra.mxu0 0.0
      %950 = vmatprep.subr.mxu0 0.0
      %951 = vmatpush1.msra.mxu0 0.0
      %952 = vmatprep.subr.mxu0 0.0
      %953 = vmatpush1.msra.mxu0 0.0
      %954 = vmatprep.subr.mxu0 0.0
      %955 = vmatpush1.msra.mxu0 0.0
      %956 = vmatprep.subr.mxu0 0.0
      %957 = vmatpush1.msra.mxu0 0.0
      %958 = vmatprep.subr.mxu0 0.0
      %959 = vmatpush1.msra.mxu0 0.0
      %960 = vmatprep.subr.mxu0 0.0
      %961 = vmatpush1.msra.mxu0 0.0
      %962 = vmatprep.subr.mxu0 0.0
      %963 = vmatpush1.msra.mxu0 0.0
      %964 = vmatprep.subr.mxu0 0.0
      %965 = vmatpush1.msra.mxu0 0.0
      %966 = vmatprep.subr.mxu0 0.0
      %967 = vmatpush1.msra.mxu0 0.0
      %968 = vmatprep.subr.mxu0 0.0
      %969 = vmatpush1.msra.mxu0 0.0
      %970 = vmatprep.subr.mxu0 0.0
      %971 = vmatpush1.msra.mxu0 0.0
      %972 = vmatprep.subr.mxu0 0.0
      %973 = vmatpush1.msra.mxu0 0.0
      %974 = vmatprep.subr.mxu0 0.0
      %975 = vmatpush1.msra.mxu0 0.0
      %976 = vmatprep.subr.mxu0 0.0
      %977 = vmatpush1.msra.mxu0 0.0
      %978 = vmatprep.subr.mxu0 0.0
      %979 = vmatpush1.msra.mxu0 0.0
      %980 = vmatprep.subr.mxu0 0.0
      %981 = vmatpush1.msra.mxu0 0.0
      %982 = vmatprep.mubr.f32.mxu0 0.0
      %983 = vmatmul.mubr.f32.gmra.mrb[0].mxu0 %v910
      %v984 = vpop.f32.mrb[0].mxu0
      %v985 = vadd.f32 0.0, %v984
      %v986 = vpop.f32.mrb[0].mxu0
      %v987 = vadd.f32 0.0, %v986
      %988 = vdwg.mxu0
      %v989 = vadd.f32 %v892, %v985
      %v990 = vadd.f32 %v893, %v987
      %s991 = scalar_lea.vmem %s3, 28
      %v992 = vld [vmem:[%s991] sm:$0xf]
      %993 = vrot.lane.b32.xlu0 %v295, 95
      %v994 = vpop.permute.xlu0 %993
      %995 = vrot.lane.b32.xlu0 %v291, 95
      %v996 = vpop.permute.xlu0 %995
      %997 = vrot.lane.b32.xlu0 %v296, 95
      %v998 = vpop.permute.xlu0 %997
      %vm999 = vcmask 777216
      %v1000 = vsel %vm999, %v994, %v996
      %v1001 = vsel %vm999, %v996, %v998
      %v1003 = vsel %vm346, %v992, 0
      %v1005 = vsel %vm350, %v1000, 0
      %v1007 = vsel %vm350, %v1001, 0
      %1009 = vmatprep.subr.mxu0 %v1007
      %1010 = vmatpush1.msra.mxu0 %v1005
      %1011 = vmatprep.subr.mxu0 0.0
      %1012 = vmatpush1.msra.mxu0 0.0
      %1013 = vmatprep.subr.mxu0 0.0
      %1014 = vmatpush1.msra.mxu0 0.0
      %1015 = vmatprep.subr.mxu0 0.0
      %1016 = vmatpush1.msra.mxu0 0.0
      %1017 = vmatprep.subr.mxu0 0.0
      %1018 = vmatpush1.msra.mxu0 0.0
      %1019 = vmatprep.subr.mxu0 0.0
      %1020 = vmatpush1.msra.mxu0 0.0
      %1021 = vmatprep.subr.mxu0 0.0
      %1022 = vmatpush1.msra.mxu0 0.0
      %1023 = vmatprep.subr.mxu0 0.0
      %1024 = vmatpush1.msra.mxu0 0.0
      %1025 = vmatprep.subr.mxu0 0.0
      %1026 = vmatpush1.msra.mxu0 0.0
      %1027 = vmatprep.subr.mxu0 0.0
      %1028 = vmatpush1.msra.mxu0 0.0
      %1029 = vmatprep.subr.mxu0 0.0
      %1030 = vmatpush1.msra.mxu0 0.0
      %1031 = vmatprep.subr.mxu0 0.0
      %1032 = vmatpush1.msra.mxu0 0.0
      %1033 = vmatprep.subr.mxu0 0.0
      %1034 = vmatpush1.msra.mxu0 0.0
      %1035 = vmatprep.subr.mxu0 0.0
      %1036 = vmatpush1.msra.mxu0 0.0
      %1037 = vmatprep.subr.mxu0 0.0
      %1038 = vmatpush1.msra.mxu0 0.0
      %1039 = vmatprep.subr.mxu0 0.0
      %1040 = vmatpush1.msra.mxu0 0.0
      %1041 = vmatprep.subr.mxu0 0.0
      %1042 = vmatpush1.msra.mxu0 0.0
      %1043 = vmatprep.subr.mxu0 0.0
      %1044 = vmatpush1.msra.mxu0 0.0
      %1045 = vmatprep.subr.mxu0 0.0
      %1046 = vmatpush1.msra.mxu0 0.0
      %1047 = vmatprep.subr.mxu0 0.0
      %1048 = vmatpush1.msra.mxu0 0.0
      %1049 = vmatprep.subr.mxu0 0.0
      %1050 = vmatpush1.msra.mxu0 0.0
      %1051 = vmatprep.subr.mxu0 0.0
      %1052 = vmatpush1.msra.mxu0 0.0
      %1053 = vmatprep.subr.mxu0 0.0
      %1054 = vmatpush1.msra.mxu0 0.0
      %1055 = vmatprep.subr.mxu0 0.0
      %1056 = vmatpush1.msra.mxu0 0.0
      %1057 = vmatprep.subr.mxu0 0.0
      %1058 = vmatpush1.msra.mxu0 0.0
      %1059 = vmatprep.subr.mxu0 0.0
      %1060 = vmatpush1.msra.mxu0 0.0
      %1061 = vmatprep.subr.mxu0 0.0
      %1062 = vmatpush1.msra.mxu0 0.0
      %1063 = vmatprep.subr.mxu0 0.0
      %1064 = vmatpush1.msra.mxu0 0.0
      %1065 = vmatprep.subr.mxu0 0.0
      %1066 = vmatpush1.msra.mxu0 0.0
      %1067 = vmatprep.subr.mxu0 0.0
      %1068 = vmatpush1.msra.mxu0 0.0
      %1069 = vmatprep.subr.mxu0 0.0
      %1070 = vmatpush1.msra.mxu0 0.0
      %1071 = vmatprep.subr.mxu0 0.0
      %1072 = vmatpush1.msra.mxu0 0.0
      %1073 = vmatprep.mubr.f32.mxu0 0.0
      %1074 = vmatmul.mubr.f32.gmra.mrb[0].mxu0 %v1003
      %v1075 = vpop.f32.mrb[0].mxu0
      %v1076 = vadd.f32 0.0, %v1075
      %v1077 = vpop.f32.mrb[0].mxu0
      %v1078 = vadd.f32 0.0, %v1077
      %1079 = vdwg.mxu0
      %v1080 = vadd.f32 %v989, %v1076
      %v1081 = vadd.f32 %v990, %v1078
      %1082 = vrot.lane.b32.xlu0 %v295, 94
      %v1083 = vpop.permute.xlu0 %1082
      %1084 = vrot.lane.b32.xlu0 %v291, 94
      %v1085 = vpop.permute.xlu0 %1084
      %1086 = vrot.lane.b32.xlu0 %v296, 94
      %v1087 = vpop.permute.xlu0 %1086
      %vm1088 = vcmask 769024
      %v1089 = vsel %vm1088, %v1083, %v1085
      %v1090 = vsel %vm1088, %v1085, %v1087
      %v1093 = vsel %vm510, %v1089, 0.0
      %v1094 = vsel %vm511, %v1090, 0.0
      %s1095 = scalar_lea.vmem %s3, 32
      %v1096 = vld [vmem:[%s1095] sm:$0xf]
      %v1098 = vsel %vm346, %v1096, 0
      %v1101 = vsel %vm350, %v1093, 0
      %v1104 = vsel %vm350, %v1094, 0
      %1106 = vmatprep.subr.mxu0 %v1104
      %1107 = vmatpush1.msra.mxu0 %v1101
      %1108 = vmatprep.subr.mxu0 0.0
      %1109 = vmatpush1.msra.mxu0 0.0
      %1110 = vmatprep.subr.mxu0 0.0
      %1111 = vmatpush1.msra.mxu0 0.0
      %1112 = vmatprep.subr.mxu0 0.0
      %1113 = vmatpush1.msra.mxu0 0.0
      %1114 = vmatprep.subr.mxu0 0.0
      %1115 = vmatpush1.msra.mxu0 0.0
      %1116 = vmatprep.subr.mxu0 0.0
      %1117 = vmatpush1.msra.mxu0 0.0
      %1118 = vmatprep.subr.mxu0 0.0
      %1119 = vmatpush1.msra.mxu0 0.0
      %1120 = vmatprep.subr.mxu0 0.0
      %1121 = vmatpush1.msra.mxu0 0.0
      %1122 = vmatprep.subr.mxu0 0.0
      %1123 = vmatpush1.msra.mxu0 0.0
      %1124 = vmatprep.subr.mxu0 0.0
      %1125 = vmatpush1.msra.mxu0 0.0
      %1126 = vmatprep.subr.mxu0 0.0
      %1127 = vmatpush1.msra.mxu0 0.0
      %1128 = vmatprep.subr.mxu0 0.0
      %1129 = vmatpush1.msra.mxu0 0.0
      %1130 = vmatprep.subr.mxu0 0.0
      %1131 = vmatpush1.msra.mxu0 0.0
      %1132 = vmatprep.subr.mxu0 0.0
      %1133 = vmatpush1.msra.mxu0 0.0
      %1134 = vmatprep.subr.mxu0 0.0
      %1135 = vmatpush1.msra.mxu0 0.0
      %1136 = vmatprep.subr.mxu0 0.0
      %1137 = vmatpush1.msra.mxu0 0.0
      %1138 = vmatprep.subr.mxu0 0.0
      %1139 = vmatpush1.msra.mxu0 0.0
      %1140 = vmatprep.subr.mxu0 0.0
      %1141 = vmatpush1.msra.mxu0 0.0
      %1142 = vmatprep.subr.mxu0 0.0
      %1143 = vmatpush1.msra.mxu0 0.0
      %1144 = vmatprep.subr.mxu0 0.0
      %1145 = vmatpush1.msra.mxu0 0.0
      %1146 = vmatprep.subr.mxu0 0.0
      %1147 = vmatpush1.msra.mxu0 0.0
      %1148 = vmatprep.subr.mxu0 0.0
      %1149 = vmatpush1.msra.mxu0 0.0
      %1150 = vmatprep.subr.mxu0 0.0
      %1151 = vmatpush1.msra.mxu0 0.0
      %1152 = vmatprep.subr.mxu0 0.0
      %1153 = vmatpush1.msra.mxu0 0.0
      %1154 = vmatprep.subr.mxu0 0.0
      %1155 = vmatpush1.msra.mxu0 0.0
      %1156 = vmatprep.subr.mxu0 0.0
      %1157 = vmatpush1.msra.mxu0 0.0
      %1158 = vmatprep.subr.mxu0 0.0
      %1159 = vmatpush1.msra.mxu0 0.0
      %1160 = vmatprep.subr.mxu0 0.0
      %1161 = vmatpush1.msra.mxu0 0.0
      %1162 = vmatprep.subr.mxu0 0.0
      %1163 = vmatpush1.msra.mxu0 0.0
      %1164 = vmatprep.subr.mxu0 0.0
      %1165 = vmatpush1.msra.mxu0 0.0
      %1166 = vmatprep.subr.mxu0 0.0
      %1167 = vmatpush1.msra.mxu0 0.0
      %1168 = vmatprep.subr.mxu0 0.0
      %1169 = vmatpush1.msra.mxu0 0.0
      %1170 = vmatprep.mubr.f32.mxu0 0.0
      %1171 = vmatmul.mubr.f32.gmra.mrb[0].mxu0 %v1098
      %v1172 = vpop.f32.mrb[0].mxu0
      %v1173 = vadd.f32 0.0, %v1172
      %v1174 = vpop.f32.mrb[0].mxu0
      %v1175 = vadd.f32 0.0, %v1174
      %1176 = vdwg.mxu0
      %v1177 = vadd.f32 %v1080, %v1173
      %v1178 = vadd.f32 %v1081, %v1175
      %v1181 = vcombine.low %v1177, %v1178
      %1183 = vst [vmem:[%s246] sm:$0xff] %v1181
      %v1184 = vld [vmem:[%s5] sm:$0xf]
      %v1185 = vsel %vm350, %v1177, 0.0
      %v1186 = vsel %vm350, %v1178, 0.0
      %v1187 = vadd.f32 %v1185, %v1186
      %1188 = vadd.xlane.f32.xlu0 %v1187
      %v1189 = vpop.xlane.xlu0 %1188
      %v1190 = vadd.f32 %v1184, %v1189
      %vm1191 = vcmask 3072
      %1192 = vst.msk [vmem:[%s5] sm:$0xf] %vm1191, %v1190
      %v1193 = vld [vmem:[%s6] sm:$0xf]
      %1194 = vmatprep.subr.mxu0 %v1178
      %1195 = vmatpush1.xpose.msra.mxu0 %v1177
      %1196 = vmatprep.subr.mxu0 0.0
      %1197 = vmatpush1.xpose.msra.mxu0 0.0
      %1198 = vmatprep.subr.mxu0 0.0
      %1199 = vmatpush1.xpose.msra.mxu0 0.0
      %1200 = vmatprep.subr.mxu0 0.0
      %1201 = vmatpush1.xpose.msra.mxu0 0.0
      %1202 = vmatprep.subr.mxu0 0.0
      %1203 = vmatpush1.xpose.msra.mxu0 0.0
      %1204 = vmatprep.subr.mxu0 0.0
      %1205 = vmatpush1.xpose.msra.mxu0 0.0
      %1206 = vmatprep.subr.mxu0 0.0
      %1207 = vmatpush1.xpose.msra.mxu0 0.0
      %1208 = vmatprep.subr.mxu0 0.0
      %1209 = vmatpush1.xpose.msra.mxu0 0.0
      %1210 = vmatprep.subr.mxu0 0.0
      %1211 = vmatpush1.xpose.msra.mxu0 0.0
      %1212 = vmatprep.subr.mxu0 0.0
      %1213 = vmatpush1.xpose.msra.mxu0 0.0
      %1214 = vmatprep.subr.mxu0 0.0
      %1215 = vmatpush1.xpose.msra.mxu0 0.0
      %1216 = vmatprep.subr.mxu0 0.0
      %1217 = vmatpush1.xpose.msra.mxu0 0.0
      %1218 = vmatprep.subr.mxu0 0.0
      %1219 = vmatpush1.xpose.msra.mxu0 0.0
      %1220 = vmatprep.subr.mxu0 0.0
      %1221 = vmatpush1.xpose.msra.mxu0 0.0
      %1222 = vmatprep.subr.mxu0 0.0
      %1223 = vmatpush1.xpose.msra.mxu0 0.0
      %1224 = vmatprep.subr.mxu0 0.0
      %1225 = vmatpush1.xpose.msra.mxu0 0.0
      %1226 = vmatprep.subr.mxu0 0.0
      %1227 = vmatpush1.xpose.msra.mxu0 0.0
      %1228 = vmatprep.subr.mxu0 0.0
      %1229 = vmatpush1.xpose.msra.mxu0 0.0
      %1230 = vmatprep.subr.mxu0 0.0
      %1231 = vmatpush1.xpose.msra.mxu0 0.0
      %1232 = vmatprep.subr.mxu0 0.0
      %1233 = vmatpush1.xpose.msra.mxu0 0.0
      %1234 = vmatprep.subr.mxu0 0.0
      %1235 = vmatpush1.xpose.msra.mxu0 0.0
      %1236 = vmatprep.subr.mxu0 0.0
      %1237 = vmatpush1.xpose.msra.mxu0 0.0
      %1238 = vmatprep.subr.mxu0 0.0
      %1239 = vmatpush1.xpose.msra.mxu0 0.0
      %1240 = vmatprep.subr.mxu0 0.0
      %1241 = vmatpush1.xpose.msra.mxu0 0.0
      %1242 = vmatprep.subr.mxu0 0.0
      %1243 = vmatpush1.xpose.msra.mxu0 0.0
      %1244 = vmatprep.subr.mxu0 0.0
      %1245 = vmatpush1.xpose.msra.mxu0 0.0
      %1246 = vmatprep.subr.mxu0 0.0
      %1247 = vmatpush1.xpose.msra.mxu0 0.0
      %1248 = vmatprep.subr.mxu0 0.0
      %1249 = vmatpush1.xpose.msra.mxu0 0.0
      %1250 = vmatprep.subr.mxu0 0.0
      %1251 = vmatpush1.xpose.msra.mxu0 0.0
      %1252 = vmatprep.subr.mxu0 0.0
      %1253 = vmatpush1.xpose.msra.mxu0 0.0
      %1254 = vmatprep.subr.mxu0 0.0
      %1255 = vmatpush1.xpose.msra.mxu0 0.0
      %1256 = vmatprep.subr.mxu0 0.0
      %1257 = vmatpush1.xpose.msra.mxu0 0.0
      %1258 = vmatprep.mubr.f32.mxu0 %v1178
      %1259 = vmatmul.mubr.f32.gmra.mrb[0].mxu0 %v1177
      %v1260 = vpop.f32.mrb[0].mxu0
      %v1261 = vadd.f32 0.0, %v1260
      %v1262 = vpop.f32.mrb[0].mxu0
      %1263 = vdwg.mxu0
      %v1264 = vadd.f32 %v1193, %v1261
      %vm1265 = vcmask 27648
      %1266 = vst.msk [vmem:[%s6] sm:$0xf] %vm1265, %v1264
      %p1267 = scmp.lt.s32.totalorder %s18, 1
      %s1268 = scalar_select %p1267, %s18, 1
      %s1269 = smul.addr %s1268, 2
      %s1270 = smul.addr %s1269, 4
      %s1271 = scalar_lea.vmem %s4, %s1270
      // Predicated region
      $region41: #{bottleneck_forward.6} parent=35 // pred_check
        %p1272 = pneg %p125
      $region42: #{bottleneck_forward.6} parent=35 // pred_check_branch
        %1274 = sbr.rel (%p1272) target = $region44
      $region43: #{bottleneck_forward.6} parent=35 // pred_region
        _
      $region44: #{bottleneck_forward.6} parent=35 // pred_fallthru
        _
      // Predicated region
      $region45: #{bottleneck_forward.6} parent=35 // pred_check
        %p1275 = pneg %p146
      $region46: #{bottleneck_forward.6} parent=35 // pred_check_branch
        %1277 = sbr.rel (%p1275) target = $region48
      $region47: #{bottleneck_forward.6} parent=35 // pred_region
        _
      $region48: #{bottleneck_forward.6} parent=35 // pred_fallthru
        _
      // Predicated region
      $region49: #{bottleneck_forward.6} parent=35 // pred_check
        %p1278 = pneg %p167
      $region50: #{bottleneck_forward.6} parent=35 // pred_check_branch
        %1280 = sbr.rel (%p1278) target = $region52
      $region51: #{bottleneck_forward.6} parent=35 // pred_region
        _
      $region52: #{bottleneck_forward.6} parent=35 // pred_fallthru
        _
      // Predicated region
      $region53: #{bottleneck_forward.6} parent=35 // pred_check
        %p1281 = pneg %p146
      $region54: #{bottleneck_forward.6} parent=35 // pred_check_branch
        %1283 = sbr.rel (%p1281) target = $region56
      $region55: #{bottleneck_forward.6} parent=35 // pred_region
        _
      $region56: #{bottleneck_forward.6} parent=35 // pred_fallthru
        _
      // Predicated region
      $region57: #{bottleneck_forward.6} parent=35 // pred_check
        %p1284 = pneg %p167
      $region58: #{bottleneck_forward.6} parent=35 // pred_check_branch
        %1286 = sbr.rel (%p1284) target = $region60
      $region59: #{bottleneck_forward.6} parent=35 // pred_region
        _
      $region60: #{bottleneck_forward.6} parent=35 // pred_fallthru
        _
    $region36: #{bottleneck_forward.6} parent=5 // pred_fallthru
      _
    %p1287 = scmp.le.s32.totalorder 2, %s13
    // Predicated region
    $region61: #{bottleneck_forward.6} parent=5 // pred_check
      %p1288 = pneg %p1287
    $region62: #{bottleneck_forward.6} parent=5 // pred_check_branch
      %1290 = sbr.rel (%p1288) target = $region64
    $region63: #{bottleneck_forward.6} parent=5 // pred_region
      %s1291 = ssub.s32 %s13, 2
      // Predicated region
      $region65: #{bottleneck_forward.6} parent=63 // pred_check
        %p1292 = pneg %p131
      $region66: #{bottleneck_forward.6} parent=63 // pred_check_branch
        %1294 = sbr.rel (%p1292) target = $region68
      $region67: #{bottleneck_forward.6} parent=63 // pred_region
        %p1295 = scmp.lt.s32.totalorder %s19, 1
        %s1296 = scalar_select %p1295, %s19, 1
        %s1297 = smul.addr %s1296, 2
        %s1298 = smul.addr %s1297, 4
        %s1299 = scalar_lea.vmem %s4, %s1298
      $region68: #{bottleneck_forward.6} parent=63 // pred_fallthru
        _
    $region64: #{bottleneck_forward.6} parent=5 // pred_fallthru
      _
  $region6: #{bottleneck_forward.6} parent=0 // loop_footer
    %s17 = sadd.s32 1, %s13
  $region7: #{bottleneck_forward.6} parent=0 // loop_footer_branch
    %12 = sbr.rel target = $region3
  $region8: #{bottleneck_forward.6} parent=0 // loop_exit
    _

</llo_original>
